<compile_context>
chip_gen: v7x
topology: tpu7x:2x2x1
jax: 0.10.0
libtpu: 0.0.40
codegen_flags: <defaults>
</compile_context>

<pallas_src>
import functools

import jax
import jax.numpy as jnp
from jax.experimental import pallas as pl
from jax.experimental.pallas import tpu as pltpu


def _projection_head_kernel(x_ref, w1_ref, b1_ref, w2_ref, b2_ref,
                            gamma_ref, beta_ref, o_ref, *, sub_rows):
    # Small params promoted to f32 once per grid step (epilogue dtype).
    b1 = b1_ref[...].astype(jnp.float32)
    b2 = b2_ref[...].astype(jnp.float32)
    gamma = gamma_ref[...].astype(jnp.float32)
    beta = beta_ref[...].astype(jnp.float32)
    inv_sqrt2 = jnp.float32(0.7071067811865476)
    eps = jnp.float32(1e-5)

    n_sub = x_ref.shape[0] // sub_rows

    def body(t, carry):
        r0 = t * sub_rows
        if not isinstance(r0, int):
            r0 = pl.multiple_of(r0, sub_rows)
        x = x_ref[pl.ds(r0, sub_rows), :]

        # projection = Linear(embedding_dim, projection_dim)
        # MXU operands in the weights' dtype (bf16 path), f32 accumulation.
        projected = jnp.dot(x.astype(w1_ref.dtype), w1_ref[...],
                            preferred_element_type=jnp.float32) + b1

        # exact erf GELU (torch.nn.GELU default) — f32 epilogue.
        # (Optional tanh-approx GELU would move this work to the EUP slot.)
        g = 0.5 * projected * (1.0 + jax.lax.erf(projected * inv_sqrt2))

        # fc = Linear(projection_dim, projection_dim)
        h = jnp.dot(g.astype(w2_ref.dtype), w2_ref[...],
                    preferred_element_type=jnp.float32) + b2

        # TODO(synk): dropout is identity in eval mode; training-mode
        # stochastic dropout (pltpu.prng_random_bits mask) not implemented.

        # residual
        r = h + projected

        # LayerNorm over the projection dim, eps = 1e-5, two-pass variance.
        mean = jnp.mean(r, axis=-1, keepdims=True)
        centered = r - mean
        var = jnp.mean(centered * centered, axis=-1, keepdims=True)
        y = centered * jax.lax.rsqrt(var + eps)
        out = y * gamma + beta

        o_ref[pl.ds(r0, sub_rows), :] = out.astype(o_ref.dtype)
        return carry

    jax.lax.fori_loop(0, n_sub, body, 0, unroll=True)


def _round_up(n, m):
    return ((n + m - 1) // m) * m


def _sublane_multiple(dtype):
    # Packed dtypes need 16 (2-byte) / 32 (1-byte) rows per tile.
    return {4: 8, 2: 16, 1: 32}.get(jnp.dtype(dtype).itemsize, 8)


def _choose_block_rows(batch, dtype):
    sub = _sublane_multiple(dtype)
    if batch >= 4 * 256:
        return 256          # fills v6e/v7x 256-deep MXU M, >= 4 grid steps
    if batch >= 4 * 128:
        return 128          # fills v5e 128-deep MXU M, >= 4 grid steps
    if batch > 128:
        return 128          # MXU-aligned, 2-3 steps (ragged last block OK)
    return max(sub, _round_up(batch, sub))   # single step, dtype-aligned


@functools.partial(jax.jit, static_argnames=("block_rows",))
def projection_head(x, w1, b1, w2, b2, gamma, beta, *, block_rows=None):
    B, E = x.shape
    P = w1.shape[1]

    if block_rows is None:
        block_rows = _choose_block_rows(B, x.dtype)
    sub = _sublane_multiple(x.dtype)
    block_rows = max(sub, _round_up(block_rows, sub))

    # In-kernel sub-tiling: keep f32 intermediates to <=128 rows at a time.
    sub_rows = block_rows if block_rows <= 128 else 128
    if block_rows % sub_rows != 0:
        sub_rows = block_rows

    grid = (pl.cdiv(B, block_rows),)

    def _bytes(a):
        return a.size * a.dtype.itemsize

    cost = pl.CostEstimate(
        flops=2 * B * (E * P + P * P),
        transcendentals=B * P,  # erf in GELU
        bytes_accessed=(B * E * x.dtype.itemsize + B * P * x.dtype.itemsize
                        + _bytes(w1) + _bytes(b1) + _bytes(w2) + _bytes(b2)
                        + _bytes(gamma) + _bytes(beta)),
    )

    # VMEM budget from the actual footprint (Pallas double-buffers every
    # BlockSpec).  Each v7x TensorCore holds its own copy of the resident
    # params, so keep the cap well under its 64 MiB physical VMEM.
    tile_bytes = block_rows * (E + P) * x.dtype.itemsize
    resident = (_bytes(w1) + _bytes(b1) + _bytes(w2) + _bytes(b2)
                + _bytes(gamma) + _bytes(beta))
    footprint = 2 * (tile_bytes + resident)
    vmem_limit = int(min(48 * 1024 * 1024, max(32 * 1024 * 1024, 2 * footprint)))

    kernel = functools.partial(_projection_head_kernel, sub_rows=sub_rows)

    return pl.pallas_call(
        kernel,
        out_shape=jax.ShapeDtypeStruct((B, P), x.dtype),
        grid_spec=pltpu.PrefetchScalarGridSpec(
            num_scalar_prefetch=0,
            grid=grid,
            in_specs=[
                pl.BlockSpec((block_rows, E), lambda i: (i, 0)),  # x row tile
                pl.BlockSpec((E, P), lambda i: (0, 0)),           # W1 (resident)
                pl.BlockSpec((1, P), lambda i: (0, 0)),           # b1
                pl.BlockSpec((P, P), lambda i: (0, 0)),           # W2 (resident)
                pl.BlockSpec((1, P), lambda i: (0, 0)),           # b2
                pl.BlockSpec((1, P), lambda i: (0, 0)),           # gamma
                pl.BlockSpec((1, P), lambda i: (0, 0)),           # beta
            ],
            out_specs=pl.BlockSpec((block_rows, P), lambda i: (i, 0)),
        ),
        compiler_params=pltpu.CompilerParams(
            dimension_semantics=("parallel",),
            vmem_limit_bytes=vmem_limit,
        ),
        cost_estimate=cost,
    )(x, w1, b1, w2, b2, gamma, beta)


def _reference(x, w1, b1, w2, b2, gamma, beta):
    """Pure-JAX reference mirroring the kernel's numerics (f32 accumulation,
    MXU operands in the weights' dtype)."""
    f32 = jnp.float32
    projected = x.astype(f32) @ w1.astype(f32) + b1.astype(f32)
    g = 0.5 * projected * (1.0 + jax.lax.erf(projected * f32(0.7071067811865476)))
    g = g.astype(w2.dtype).astype(f32)       # mirror the kernel's MXU-input cast
    h = g @ w2.astype(f32) + b2.astype(f32)
    r = h + projected
    mean = jnp.mean(r, axis=-1, keepdims=True)
    var = jnp.mean((r - mean) ** 2, axis=-1, keepdims=True)
    y = (r - mean) / jnp.sqrt(var + 1e-5)
    return y * gamma.astype(f32) + beta.astype(f32)


if __name__ == "__main__":
    embedding_dim = 32
    projection_dim = 256   # module default
    batch = 200            # 2 grid steps of 128 rows + ragged last block

    key = jax.random.PRNGKey(0)
    kx, k1, kb1, k2, kb2 = jax.random.split(key, 5)

    dt = jnp.bfloat16      # bf16 operands feed the MXU at full rate

    x = jax.random.normal(kx, (batch, embedding_dim), dtype=jnp.float32).astype(dt)

    # Deterministic synthetic parameters (shapes per nn.Linear / nn.LayerNorm,
    # weights pre-transposed to [in, out]).
    w1 = (jax.random.normal(k1, (embedding_dim, projection_dim), dtype=jnp.float32)
          * (1.0 / jnp.sqrt(embedding_dim))).astype(dt)
    b1 = (jax.random.normal(kb1, (1, projection_dim), dtype=jnp.float32) * 0.01).astype(dt)
    w2 = (jax.random.normal(k2, (projection_dim, projection_dim), dtype=jnp.float32)
          * (1.0 / jnp.sqrt(projection_dim))).astype(dt)
    b2 = (jax.random.normal(kb2, (1, projection_dim), dtype=jnp.float32) * 0.01).astype(dt)
    gamma = jnp.ones((1, projection_dim), dtype=dt)
    beta = jnp.zeros((1, projection_dim), dtype=dt)

    out = projection_head(x, w1, b1, w2, b2, gamma, beta)
    out = jax.block_until_ready(out)

    ref = _reference(x, w1, b1, w2, b2, gamma, beta)
    assert out.shape == (batch, projection_dim)
    err = float(jnp.max(jnp.abs(out.astype(jnp.float32) - ref)))
    # Output is bf16: allow ~1 bf16 ulp at |value|~3 plus accumulation-order noise.
    assert err < 3e-2, f"mismatch vs reference: max abs err {err}"

    print("KERNEL_OK")
</pallas_src>

<mosaic_0001>
module attributes {stable_mosaic.version = 11 : i64} {
  func.func @_projection_head_kernel(%arg0: i32, %arg1: memref<128x32xbf16, #tpu.memory_space<vmem>>, %arg2: memref<32x256xbf16, #tpu.memory_space<vmem>>, %arg3: memref<1x256xbf16, #tpu.memory_space<vmem>>, %arg4: memref<256x256xbf16, #tpu.memory_space<vmem>>, %arg5: memref<1x256xbf16, #tpu.memory_space<vmem>>, %arg6: memref<1x256xbf16, #tpu.memory_space<vmem>>, %arg7: memref<1x256xbf16, #tpu.memory_space<vmem>>, %arg8: memref<128x256xbf16, #tpu.memory_space<vmem>>) attributes {dimension_semantics = [#tpu.dimension_semantics<parallel>], iteration_bounds = array<i64: 2>, scalar_prefetch = 0 : i64, scratch_operands = 0 : i64, tpu.core_type = #tpu.core_type<tc>, window_params = [{transform_indices = @transform_0, window_bounds = array<i64: 128, 32>}, {pipeline_mode = #tpu.pipeline_mode<synchronous>, transform_indices = @transform_1, window_bounds = array<i64: 32, 256>}, {pipeline_mode = #tpu.pipeline_mode<synchronous>, transform_indices = @transform_2, window_bounds = array<i64: 1, 256>}, {pipeline_mode = #tpu.pipeline_mode<synchronous>, transform_indices = @transform_3, window_bounds = array<i64: 256, 256>}, {pipeline_mode = #tpu.pipeline_mode<synchronous>, transform_indices = @transform_4, window_bounds = array<i64: 1, 256>}, {pipeline_mode = #tpu.pipeline_mode<synchronous>, transform_indices = @transform_5, window_bounds = array<i64: 1, 256>}, {pipeline_mode = #tpu.pipeline_mode<synchronous>, transform_indices = @transform_6, window_bounds = array<i64: 1, 256>}, {transform_indices = @transform_7, window_bounds = array<i64: 128, 256>}]} {
    %c0 = arith.constant 0 : index
    %c0_0 = arith.constant 0 : index
    %0 = vector.load %arg3[%c0, %c0_0] : memref<1x256xbf16, #tpu.memory_space<vmem>>, vector<1x256xbf16>
    %1 = arith.extf %0 : vector<1x256xbf16> to vector<1x256xf32>
    %c0_1 = arith.constant 0 : index
    %c0_2 = arith.constant 0 : index
    %2 = vector.load %arg5[%c0_1, %c0_2] : memref<1x256xbf16, #tpu.memory_space<vmem>>, vector<1x256xbf16>
    %3 = arith.extf %2 : vector<1x256xbf16> to vector<1x256xf32>
    %c0_3 = arith.constant 0 : index
    %c0_4 = arith.constant 0 : index
    %4 = vector.load %arg6[%c0_3, %c0_4] : memref<1x256xbf16, #tpu.memory_space<vmem>>, vector<1x256xbf16>
    %5 = arith.extf %4 : vector<1x256xbf16> to vector<1x256xf32>
    %c0_5 = arith.constant 0 : index
    %c0_6 = arith.constant 0 : index
    %6 = vector.load %arg7[%c0_5, %c0_6] : memref<1x256xbf16, #tpu.memory_space<vmem>>, vector<1x256xbf16>
    %7 = arith.extf %6 : vector<1x256xbf16> to vector<1x256xf32>
    %cst = arith.constant 0.707106769 : f32
    %cst_7 = arith.constant 9.99999974E-6 : f32
    %c0_i32 = arith.constant 0 : i32
    %c128_i32 = arith.constant 128 : i32
    %8 = arith.muli %c0_i32, %c128_i32 : i32
    %9 = tpu.assume_multiple %8, 128 : i32
    %10 = arith.index_cast %9 : i32 to index
    %c0_8 = arith.constant 0 : index
    %11 = vector.load %arg1[%10, %c0_8] : memref<128x32xbf16, #tpu.memory_space<vmem>>, vector<128x32xbf16>
    %c0_9 = arith.constant 0 : index
    %c0_10 = arith.constant 0 : index
    %12 = vector.load %arg2[%c0_9, %c0_10] : memref<32x256xbf16, #tpu.memory_space<vmem>>, vector<32x256xbf16>
    %cst_11 = arith.constant dense<0.000000e+00> : vector<128x256xf32>
    %13 = tpu.matmul %11, %12, %cst_11 {dimension_numbers = #tpu.dot_dimension_numbers<[1], [0], [0], [1], [0, 0, 1, 1], [], []>} : vector<128x32xbf16>, vector<32x256xbf16>, vector<128x256xf32> -> vector<128x256xf32>
    %14 = vector.broadcast %1 : vector<1x256xf32> to vector<128x256xf32>
    %15 = arith.addf %13, %14 : vector<128x256xf32>
    %cst_12 = arith.constant 5.000000e-01 : f32
    %16 = vector.broadcast %cst_12 : f32 to vector<128x256xf32>
    %17 = arith.mulf %16, %15 : vector<128x256xf32>
    %18 = vector.broadcast %cst : f32 to vector<128x256xf32>
    %19 = arith.mulf %15, %18 : vector<128x256xf32>
    %20 = math.erf %19 : vector<128x256xf32>
    %cst_13 = arith.constant 1.000000e+00 : f32
    %21 = vector.broadcast %cst_13 : f32 to vector<128x256xf32>
    %22 = arith.addf %21, %20 : vector<128x256xf32>
    %23 = arith.mulf %17, %22 : vector<128x256xf32>
    %24 = arith.truncf %23 : vector<128x256xf32> to vector<128x256xbf16>
    %c0_14 = arith.constant 0 : index
    %c0_15 = arith.constant 0 : index
    %25 = vector.load %arg4[%c0_14, %c0_15] : memref<256x256xbf16, #tpu.memory_space<vmem>>, vector<256x256xbf16>
    %cst_16 = arith.constant dense<0.000000e+00> : vector<128x256xf32>
    %26 = tpu.matmul %24, %25, %cst_16 {dimension_numbers = #tpu.dot_dimension_numbers<[1], [0], [0], [1], [0, 0, 1, 1], [], []>} : vector<128x256xbf16>, vector<256x256xbf16>, vector<128x256xf32> -> vector<128x256xf32>
    %27 = vector.broadcast %3 : vector<1x256xf32> to vector<128x256xf32>
    %28 = arith.addf %26, %27 : vector<128x256xf32>
    %29 = arith.addf %28, %15 : vector<128x256xf32>
    %cst_17 = arith.constant dense<0.000000e+00> : vector<128xf32>
    %30 = vector.multi_reduction <add>, %29, %cst_17 [1] : vector<128x256xf32> to vector<128xf32>
    %31 = vector.shape_cast %30 : vector<128xf32> to vector<128x1xf32>
    %cst_18 = arith.constant 2.560000e+02 : f32
    %32 = vector.broadcast %cst_18 : f32 to vector<128x1xf32>
    %33 = arith.divf %31, %32 : vector<128x1xf32>
    %34 = vector.broadcast %33 : vector<128x1xf32> to vector<128x256xf32>
    %35 = arith.subf %29, %34 : vector<128x256xf32>
    %36 = arith.mulf %35, %35 : vector<128x256xf32>
    %cst_19 = arith.constant dense<0.000000e+00> : vector<128xf32>
    %37 = vector.multi_reduction <add>, %36, %cst_19 [1] : vector<128x256xf32> to vector<128xf32>
    %38 = vector.shape_cast %37 : vector<128xf32> to vector<128x1xf32>
    %cst_20 = arith.constant 2.560000e+02 : f32
    %39 = vector.broadcast %cst_20 : f32 to vector<128x1xf32>
    %40 = arith.divf %38, %39 : vector<128x1xf32>
    %41 = vector.broadcast %cst_7 : f32 to vector<128x1xf32>
    %42 = arith.addf %40, %41 : vector<128x1xf32>
    %43 = math.rsqrt %42 : vector<128x1xf32>
    %44 = vector.broadcast %43 : vector<128x1xf32> to vector<128x256xf32>
    %45 = arith.mulf %35, %44 : vector<128x256xf32>
    %46 = vector.broadcast %5 : vector<1x256xf32> to vector<128x256xf32>
    %47 = arith.mulf %45, %46 : vector<128x256xf32>
    %48 = vector.broadcast %7 : vector<1x256xf32> to vector<128x256xf32>
    %49 = arith.addf %47, %48 : vector<128x256xf32>
    %50 = arith.truncf %49 : vector<128x256xf32> to vector<128x256xbf16>
    %51 = arith.index_cast %9 : i32 to index
    %c0_21 = arith.constant 0 : index
    %52 = vector.load %arg8[%51, %c0_21] : memref<128x256xbf16, #tpu.memory_space<vmem>>, vector<128x256xbf16>
    tpu.vector_store %arg8[%51, %c0_21], %50 {strides = array<i32>} : memref<128x256xbf16, #tpu.memory_space<vmem>>, vector<128x256xbf16>,
    %c1_i32 = arith.constant 1 : i32
    return
  }
  func.func @transform_0(%arg0: i32) -> (i32, i32) {
    %c0_i32 = arith.constant 0 : i32
    %c0_i32_0 = arith.constant 0 : i32
    return %arg0, %c0_i32 : i32, i32
  }
  func.func @transform_1(%arg0: i32) -> (i32, i32) {
    %c0_i32 = arith.constant 0 : i32
    %c0_i32_0 = arith.constant 0 : i32
    %c0_i32_1 = arith.constant 0 : i32
    return %c0_i32, %c0_i32_0 : i32, i32
  }
  func.func @transform_2(%arg0: i32) -> (i32, i32) {
    %c0_i32 = arith.constant 0 : i32
    %c0_i32_0 = arith.constant 0 : i32
    %c0_i32_1 = arith.constant 0 : i32
    return %c0_i32, %c0_i32_0 : i32, i32
  }
  func.func @transform_3(%arg0: i32) -> (i32, i32) {
    %c0_i32 = arith.constant 0 : i32
    %c0_i32_0 = arith.constant 0 : i32
    %c0_i32_1 = arith.constant 0 : i32
    return %c0_i32, %c0_i32_0 : i32, i32
  }
  func.func @transform_4(%arg0: i32) -> (i32, i32) {
    %c0_i32 = arith.constant 0 : i32
    %c0_i32_0 = arith.constant 0 : i32
    %c0_i32_1 = arith.constant 0 : i32
    return %c0_i32, %c0_i32_0 : i32, i32
  }
  func.func @transform_5(%arg0: i32) -> (i32, i32) {
    %c0_i32 = arith.constant 0 : i32
    %c0_i32_0 = arith.constant 0 : i32
    %c0_i32_1 = arith.constant 0 : i32
    return %c0_i32, %c0_i32_0 : i32, i32
  }
  func.func @transform_6(%arg0: i32) -> (i32, i32) {
    %c0_i32 = arith.constant 0 : i32
    %c0_i32_0 = arith.constant 0 : i32
    %c0_i32_1 = arith.constant 0 : i32
    return %c0_i32, %c0_i32_0 : i32, i32
  }
  func.func @transform_7(%arg0: i32) -> (i32, i32) {
    %c0_i32 = arith.constant 0 : i32
    %c0_i32_0 = arith.constant 0 : i32
    return %arg0, %c0_i32 : i32, i32
  }
}

</mosaic_0001>

<llo_original>
// kernel: projection_head.1
$region0: #{projection_head.1}
  #allocation0 [shape = 'u32[]', space=smem, size = 0x4, offset = 0x4, fixed_abs, tag = 'smem constant byte address 0x4 - core index']
  #allocation1 [shape = 'u32[144,128]{1,0:T(1,128)}', space=vmem, size = 0x12000, scoped, tag = 'internal scratch']
  %s0 = inlined_call_operand.vmem [shape: bf16[200,32], index: 0, kind: input, shape index: {}]
  %s1 = inlined_call_operand.vmem [shape: bf16[32,256], index: 1, kind: input, shape index: {}]
  %s2 = inlined_call_operand.vmem [shape: bf16[1,256], index: 2, kind: input, shape index: {}]
  %s3 = inlined_call_operand.hbm [shape: bf16[256,256], index: 3, kind: input, shape index: {}]
  %s4 = inlined_call_operand.vmem [shape: bf16[1,256], index: 4, kind: input, shape index: {}]
  %s5 = inlined_call_operand.vmem [shape: bf16[1,256], index: 5, kind: input, shape index: {}]
  %s6 = inlined_call_operand.vmem [shape: bf16[1,256], index: 6, kind: input, shape index: {}]
  %s7 = inlined_call_operand.hbm [shape: bf16[200,256], index: 7, kind: output, shape index: {}]
  %s8 = sld [smem:[#allocation0]]
  $region65: #{projection_head.1} parent=0
    _
  %s10 = ssub.s32 1, %s8
  %s11 = scalar_select 0, %s10, %s8
  $region1: #{projection_head.1} parent=0
    #allocation2 [shape = 'u8[131072]{0}', space=vmem, size = 0x20000, scoped, tag = 'input window, operand 3, single buffered']
    #allocation3 [shape = 's32[2]{0}', space=sflag, size = 0x8, scoped, tag = 'scoped memory for projection_head.1']
    #allocation4 [shape = 's32[2]{0}', space=sflag, size = 0x8, scoped, tag = 'scoped memory for projection_head.1']
    #allocation5 [shape = 'u8[131072]{0}', space=vmem, size = 0x20000, scoped, tag = 'output window, operand 0']
    %12 = vsyncpa [#allocation3], 0
    %13 = vsyncpa [#allocation4], 0
    %s14 = scalar_lea.sflag [#allocation4], 1
    %15 = vsyncpa %s14, 0
    loop: start=0, step=1, limit=4
    $region2: #{projection_head.1} parent=1 // loop_pre_header
      _
    $region3: #{projection_head.1} parent=1 // loop_header
      %s17 = sphi 0, %s21
      %p18 = scmp.ge.s32.totalorder %s17, 4
      %s27 = sphi 0, %s29
      %s30 = sphi 0, %s27
      %s31 = sphi 0, %s30
      %s47 = sphi 0, %s31
      %s51 = sphi 0, %s51
      %s53 = sphi 0, %s51
      %s54 = sphi 0, %s53
      %s68 = sphi 0, %s54
      %s72 = sphi 0, %s72
      %s74 = sphi 0, %s72
      %s75 = sphi 0, %s74
      %s89 = sphi 0, %s75
      %s93 = sphi 0, %s93
      %s95 = sphi 0, %s93
      %s96 = sphi 0, %s95
      %s110 = sphi 0, %s96
      %s114 = sphi 0, %s114
      %s116 = sphi 0, %s114
      %s117 = sphi 0, %s116
      %s131 = sphi 0, %s117
      %s135 = sphi 0, %s135
      %s137 = sphi 0, %s135
      %s138 = sphi 0, %s137
      %s152 = sphi 0, %s138
      %s156 = sphi 0, %s156
      %s158 = sphi 0, %s156
      %s159 = sphi 0, %s158
      %s173 = sphi 0, %s159
      %s179 = sphi 0, %s181
      %s182 = sphi 0, %s179
      %s183 = sphi 0, %s182
      %s199 = sphi 0, %s183
    $region4: #{projection_head.1} parent=1 // loop_header_branch
      %20 = sbr.rel (%p18) target = $region8
    $region5: #{projection_head.1} parent=1 // loop_body
      %s22 = ssub.s32 %s17, 1
      %s23 = ssub.s32 %s17, 2
      %s24 = sadd.s32 %s17, 1
      %s25 = ssub.s32 %s17, %s24
      %p26 = scmp.eq.s32.totalorder %s25, 0
      %s28 = sadd.s32 %s27, 1
      %s29 = scalar_select %p26, %s27, %s28
      %p32 = pneg %p26
      %p33 = scmp.eq.s32.totalorder %s17, 1
      %p34 = por %p32, %p33
      %p35 = scmp.ne.s32.totalorder %s27, %s30
      %p36 = scmp.eq.s32.totalorder %s17, 0
      %p37 = por %p35, %p36
      %p38 = scmp.ne.s32.totalorder %s27, %s30
      %p39 = scmp.eq.s32.totalorder %s22, 1
      %p40 = por %p38, %p39
      %p41 = scmp.ne.s32.totalorder %s30, %s31
      %p42 = scmp.eq.s32.totalorder %s22, 0
      %p43 = por %p41, %p42
      %p44 = scmp.ne.s32.totalorder %s30, %s31
      %p45 = scmp.eq.s32.totalorder %s23, 1
      %p46 = por %p44, %p45
      %p48 = scmp.ne.s32.totalorder %s31, %s47
      %p49 = scmp.eq.s32.totalorder %s23, 0
      %p50 = por %p48, %p49
      %s52 = sadd.s32 %s51, 1
      %p55 = scmp.eq.s32.totalorder %s17, 1
      %p56 = scmp.ne.s32.totalorder %s51, %s53
      %p57 = scmp.eq.s32.totalorder %s17, 0
      %p58 = por %p56, %p57
      %p59 = scmp.ne.s32.totalorder %s51, %s53
      %p60 = scmp.eq.s32.totalorder %s22, 1
      %p61 = por %p59, %p60
      %p62 = scmp.ne.s32.totalorder %s53, %s54
      %p63 = scmp.eq.s32.totalorder %s22, 0
      %p64 = por %p62, %p63
      %p65 = scmp.ne.s32.totalorder %s53, %s54
      %p66 = scmp.eq.s32.totalorder %s23, 1
      %p67 = por %p65, %p66
      %p69 = scmp.ne.s32.totalorder %s54, %s68
      %p70 = scmp.eq.s32.totalorder %s23, 0
      %p71 = por %p69, %p70
      %s73 = sadd.s32 %s72, 1
      %p76 = scmp.eq.s32.totalorder %s17, 1
      %p77 = scmp.ne.s32.totalorder %s72, %s74
      %p78 = scmp.eq.s32.totalorder %s17, 0
      %p79 = por %p77, %p78
      %p80 = scmp.ne.s32.totalorder %s72, %s74
      %p81 = scmp.eq.s32.totalorder %s22, 1
      %p82 = por %p80, %p81
      %p83 = scmp.ne.s32.totalorder %s74, %s75
      %p84 = scmp.eq.s32.totalorder %s22, 0
      %p85 = por %p83, %p84
      %p86 = scmp.ne.s32.totalorder %s74, %s75
      %p87 = scmp.eq.s32.totalorder %s23, 1
      %p88 = por %p86, %p87
      %p90 = scmp.ne.s32.totalorder %s75, %s89
      %p91 = scmp.eq.s32.totalorder %s23, 0
      %p92 = por %p90, %p91
      %s94 = sadd.s32 %s93, 1
      %p97 = scmp.eq.s32.totalorder %s17, 1
      %p98 = scmp.ne.s32.totalorder %s93, %s95
      %p99 = scmp.eq.s32.totalorder %s17, 0
      %p100 = por %p98, %p99
      %p101 = scmp.ne.s32.totalorder %s93, %s95
      %p102 = scmp.eq.s32.totalorder %s22, 1
      %p103 = por %p101, %p102
      %p104 = scmp.ne.s32.totalorder %s95, %s96
      %p105 = scmp.eq.s32.totalorder %s22, 0
      %p106 = por %p104, %p105
      %p107 = scmp.ne.s32.totalorder %s95, %s96
      %p108 = scmp.eq.s32.totalorder %s23, 1
      %p109 = por %p107, %p108
      %p111 = scmp.ne.s32.totalorder %s96, %s110
      %p112 = scmp.eq.s32.totalorder %s23, 0
      %p113 = por %p111, %p112
      %s115 = sadd.s32 %s114, 1
      %p118 = scmp.eq.s32.totalorder %s17, 1
      %p119 = scmp.ne.s32.totalorder %s114, %s116
      %p120 = scmp.eq.s32.totalorder %s17, 0
      %p121 = por %p119, %p120
      %p122 = scmp.ne.s32.totalorder %s114, %s116
      %p123 = scmp.eq.s32.totalorder %s22, 1
      %p124 = por %p122, %p123
      %p125 = scmp.ne.s32.totalorder %s116, %s117
      %p126 = scmp.eq.s32.totalorder %s22, 0
      %p127 = por %p125, %p126
      %p128 = scmp.ne.s32.totalorder %s116, %s117
      %p129 = scmp.eq.s32.totalorder %s23, 1
      %p130 = por %p128, %p129
      %p132 = scmp.ne.s32.totalorder %s117, %s131
      %p133 = scmp.eq.s32.totalorder %s23, 0
      %p134 = por %p132, %p133
      %s136 = sadd.s32 %s135, 1
      %p139 = scmp.eq.s32.totalorder %s17, 1
      %p140 = scmp.ne.s32.totalorder %s135, %s137
      %p141 = scmp.eq.s32.totalorder %s17, 0
      %p142 = por %p140, %p141
      %p143 = scmp.ne.s32.totalorder %s135, %s137
      %p144 = scmp.eq.s32.totalorder %s22, 1
      %p145 = por %p143, %p144
      %p146 = scmp.ne.s32.totalorder %s137, %s138
      %p147 = scmp.eq.s32.totalorder %s22, 0
      %p148 = por %p146, %p147
      %p149 = scmp.ne.s32.totalorder %s137, %s138
      %p150 = scmp.eq.s32.totalorder %s23, 1
      %p151 = por %p149, %p150
      %p153 = scmp.ne.s32.totalorder %s138, %s152
      %p154 = scmp.eq.s32.totalorder %s23, 0
      %p155 = por %p153, %p154
      %s157 = sadd.s32 %s156, 1
      %p160 = scmp.eq.s32.totalorder %s17, 1
      %p161 = scmp.ne.s32.totalorder %s156, %s158
      %p162 = scmp.eq.s32.totalorder %s17, 0
      %p163 = por %p161, %p162
      %p164 = scmp.ne.s32.totalorder %s156, %s158
      %p165 = scmp.eq.s32.totalorder %s22, 1
      %p166 = por %p164, %p165
      %p167 = scmp.ne.s32.totalorder %s158, %s159
      %p168 = scmp.eq.s32.totalorder %s22, 0
      %p169 = por %p167, %p168
      %p170 = scmp.ne.s32.totalorder %s158, %s159
      %p171 = scmp.eq.s32.totalorder %s23, 1
      %p172 = por %p170, %p171
      %p174 = scmp.ne.s32.totalorder %s159, %s173
      %p175 = scmp.eq.s32.totalorder %s23, 0
      %p176 = por %p174, %p175
      %s177 = ssub.s32 %s17, %s24
      %p178 = scmp.eq.s32.totalorder %s177, 0
      %s180 = sadd.s32 %s179, 1
      %s181 = scalar_select %p178, %s179, %s180
      %p184 = pneg %p178
      %p185 = scmp.eq.s32.totalorder %s17, 1
      %p186 = por %p184, %p185
      %p187 = scmp.ne.s32.totalorder %s179, %s182
      %p188 = scmp.eq.s32.totalorder %s17, 0
      %p189 = por %p187, %p188
      %p190 = scmp.ne.s32.totalorder %s179, %s182
      %p191 = scmp.eq.s32.totalorder %s22, 1
      %p192 = por %p190, %p191
      %p193 = scmp.ne.s32.totalorder %s182, %s183
      %p194 = scmp.eq.s32.totalorder %s22, 0
      %p195 = por %p193, %p194
      %p196 = scmp.ne.s32.totalorder %s182, %s183
      %p197 = scmp.eq.s32.totalorder %s23, 1
      %p198 = por %p196, %p197
      %p200 = scmp.ne.s32.totalorder %s183, %s199
      %p201 = scmp.eq.s32.totalorder %s23, 0
      %p202 = por %p200, %p201
      %p203 = scmp.le.s32.totalorder 1, %s17
      %p204 = scmp.lt.s32.totalorder %s17, 3
      %p205 = pnand %p203, %p204
      %p206 = pneg %p205
      // Predicated region
      $region9: #{projection_head.1} parent=5 // pred_check
        _
      $region10: #{projection_head.1} parent=5 // pred_check_branch
        %208 = sbr.rel (%p205) target = $region12
      $region11: #{projection_head.1} parent=5 // pred_region
        %s209 = ssub.s32 %s17, 1
        // Predicated region
        $region13: #{projection_head.1} parent=11 // pred_check
          %p210 = pneg %p64
        $region14: #{projection_head.1} parent=11 // pred_check_branch
          %212 = sbr.rel (%p210) target = $region16
        $region15: #{projection_head.1} parent=11 // pred_region
          _
        $region16: #{projection_head.1} parent=11 // pred_fallthru
          _
        // Predicated region
        $region17: #{projection_head.1} parent=11 // pred_check
          %p213 = pneg %p85
        $region18: #{projection_head.1} parent=11 // pred_check_branch
          %215 = sbr.rel (%p213) target = $region20
        $region19: #{projection_head.1} parent=11 // pred_region
          _
        $region20: #{projection_head.1} parent=11 // pred_fallthru
          _
        // Predicated region
        $region21: #{projection_head.1} parent=11 // pred_check
          %p216 = pneg %p106
        $region22: #{projection_head.1} parent=11 // pred_check_branch
          %218 = sbr.rel (%p216) target = $region24
        $region23: #{projection_head.1} parent=11 // pred_region
          %s220 = ssub.s32 4096, 4096
          %221 = vsyncadd [#allocation3], %s220
          %s222 = sshll.u32 [#allocation2], 4
          %s223 = int_to_ptr.vmem [resolvable:$true] %s222
          %228 = dma.hbm_to_vmem [thread:$0]  %s3, 4096, %s223, [#allocation3], 128, 128, 8
        $region24: #{projection_head.1} parent=11 // pred_fallthru
          _
        // Predicated region
        $region25: #{projection_head.1} parent=11 // pred_check
          %p229 = pneg %p127
        $region26: #{projection_head.1} parent=11 // pred_check_branch
          %231 = sbr.rel (%p229) target = $region28
        $region27: #{projection_head.1} parent=11 // pred_region
          _
        $region28: #{projection_head.1} parent=11 // pred_fallthru
          _
        // Predicated region
        $region29: #{projection_head.1} parent=11 // pred_check
          %p232 = pneg %p148
        $region30: #{projection_head.1} parent=11 // pred_check_branch
          %234 = sbr.rel (%p232) target = $region32
        $region31: #{projection_head.1} parent=11 // pred_region
          _
        $region32: #{projection_head.1} parent=11 // pred_fallthru
          _
        // Predicated region
        $region33: #{projection_head.1} parent=11 // pred_check
          %p235 = pneg %p169
        $region34: #{projection_head.1} parent=11 // pred_check_branch
          %237 = sbr.rel (%p235) target = $region36
        $region35: #{projection_head.1} parent=11 // pred_region
          _
        $region36: #{projection_head.1} parent=11 // pred_fallthru
          _
      $region12: #{projection_head.1} parent=5 // pred_fallthru
        _
      %p238 = scmp.lt.s32.totalorder %s17, 2
      // Predicated region
      $region37: #{projection_head.1} parent=5 // pred_check
        %p239 = pneg %p238
      $region38: #{projection_head.1} parent=5 // pred_check_branch
        %241 = sbr.rel (%p239) target = $region40
      $region39: #{projection_head.1} parent=5 // pred_region
        // Predicated region
        $region41: #{projection_head.1} parent=39 // pred_check
          %p242 = pneg %p37
        $region42: #{projection_head.1} parent=39 // pred_check_branch
          %244 = sbr.rel (%p242) target = $region44
        $region43: #{projection_head.1} parent=39 // pred_region
          %s245 = smul.u32 16, %s17
          %s246 = ssub.s32 25, %s245
          %p247 = scmp.lt.s32.totalorder %s246, 16
          %s248 = scalar_select %p247, %s246, 16
          %s249 = smul.u32 64, %s248
          %p250 = scmp.lt.s32.totalorder %s245, 24
          %s251 = scalar_select %p250, %s245, 24
          %s252 = smul.addr %s251, 4
          %s253 = scalar_lea.vmem %s0, %s252
          %s254 = smul.u32 16, %s17
          %s255 = ssub.s32 25, %s254
          %p256 = scmp.lt.s32.totalorder %s255, 16
          %s257 = scalar_select %p256, %s255, 16
          %s258 = smul.u32 64, %s257
        $region44: #{projection_head.1} parent=39 // pred_fallthru
          _
      $region40: #{projection_head.1} parent=5 // pred_fallthru
        _
      %p259 = scmp.le.s32.totalorder 1, %s17
      %p260 = scmp.lt.s32.totalorder %s17, 3
      %p261 = pnand %p259, %p260
      %p262 = pneg %p261
      // Predicated region
      $region45: #{projection_head.1} parent=5 // pred_check
        _
      $region46: #{projection_head.1} parent=5 // pred_check_branch
        %264 = sbr.rel (%p261) target = $region48
      $region47: #{projection_head.1} parent=5 // pred_region
        %s265 = ssub.s32 %s17, 1
        // Predicated region
        $region49: #{projection_head.1} parent=47 // pred_check
          %p266 = pneg %p106
        $region50: #{projection_head.1} parent=47 // pred_check_branch
          %268 = sbr.rel (%p266) target = $region52
        $region51: #{projection_head.1} parent=47 // pred_region
          %269 = dma.done [#allocation3], 4096
        $region52: #{projection_head.1} parent=47 // pred_fallthru
          _
        %s270 = smul.u32 16, %s22
        %s271 = ssub.s32 25, %s270
        %p272 = scmp.lt.s32.totalorder %s271, 16
        %s273 = scalar_select %p272, %s271, 16
        %s274 = smul.u32 64, %s273
        %p275 = scmp.lt.s32.totalorder %s270, 24
        %s276 = scalar_select %p275, %s270, 24
        %s277 = smul.addr %s276, 4
        %s278 = scalar_lea.vmem %s0, %s277
        %p279 = pneg %p43
        %p280 = pneg %p40
        %p281 = pneg %p64
        %p282 = pneg %p61
        %p283 = pneg %p85
        %p284 = pneg %p82
        %p285 = pneg %p106
        %p286 = pneg %p103
        %p287 = pneg %p127
        %p288 = pneg %p124
        %p289 = pneg %p148
        %p290 = pneg %p145
        %p291 = pneg %p169
        %p292 = pneg %p166
        %p293 = pneg %p195
        %p294 = pneg %p192
        %s295 = sand.u32 %s182, 1
        %s296 = scalar_lea.sflag [#allocation4], %s295
        %s297 = sand.u32 %s182, 1
        %s298 = smul.addr %s297, 128
        %s299 = scalar_lea.vmem [#allocation5], %s298
        %s300 = smul.u32 16, %s22
        %s301 = ssub.s32 25, %s300
        %p302 = scmp.lt.s32.totalorder %s301, 16
        %s303 = scalar_select %p302, %s301, 16
        %s304 = smul.u32 64, %s303
        %p305 = scmp.lt.s32.totalorder %s300, 24
        %s306 = scalar_select %p305, %s300, 24
        %s307 = smul.addr %s306, 4
        %s308 = scalar_lea.vmem %s0, %s307
        %s309 = smul.u32 16, %s22
        %s310 = ssub.s32 25, %s309
        %p311 = scmp.lt.s32.totalorder %s310, 16
        %s312 = scalar_select %p311, %s310, 16
        %s313 = smul.u32 64, %s312
        %s314 = smul.u32 16, %s22
        %s315 = ssub.s32 25, %s314
        %p316 = scmp.lt.s32.totalorder %s315, 16
        %s317 = scalar_select %p316, %s315, 16
        %s318 = smul.u32 64, %s317
        %s319 = smul.u32 %s318, 2
        %v321 = vld [vmem:[%s2] sm:$0x3]
        %v322 = vunpack.c.l.bf16 %v321
        %v323 = vld [vmem:[%s4] sm:$0x3]
        %v324 = vunpack.c.l.bf16 %v323
        %v325 = vld [vmem:[%s5] sm:$0x3]
        %v326 = vunpack.c.l.bf16 %v325
        %v327 = vld [vmem:[%s6] sm:$0x3]
        %v328 = vunpack.c.l.bf16 %v327
        %v329 = vld [vmem:[%s308] sm:$0xf]
        %v330 = vld [vmem:[%s308 + $0x4] sm:$0xf]
        %v331 = vld [vmem:[%s308 + $0x8] sm:$0xf]
        %v332 = vld [vmem:[%s308 + $0xc] sm:$0xf]
        %v333 = vld [vmem:[%s308 + $0x10] sm:$0xf]
        %v334 = vld [vmem:[%s308 + $0x14] sm:$0xf]
        %v335 = vld [vmem:[%s308 + $0x18] sm:$0xf]
        %v336 = vld [vmem:[%s308 + $0x1c] sm:$0xf]
        %v337 = vld [vmem:[%s308 + $0x20] sm:$0xf]
        %v338 = vld [vmem:[%s308 + $0x24] sm:$0xf]
        %v339 = vld [vmem:[%s308 + $0x28] sm:$0xf]
        %v340 = vld [vmem:[%s308 + $0x2c] sm:$0xf]
        %v341 = vld [vmem:[%s308 + $0x30] sm:$0xf]
        %v342 = vld [vmem:[%s308 + $0x34] sm:$0xf]
        %v343 = vld [vmem:[%s308 + $0x38] sm:$0xf]
        %v344 = vld [vmem:[%s308 + $0x3c] sm:$0xf]
        %v345 = vld [vmem:[%s1] sm:$0xff]
        %v346 = vld [vmem:[%s1 + $0x8] sm:$0xff]
        %v347 = vld [vmem:[%s1 + $0x10] sm:$0xff]
        %v348 = vld [vmem:[%s1 + $0x18] sm:$0xff]
        %v350 = vlaneseq
        %v351 = vshrl.u32 %v350, 7
        %v352 = vsub.s32 0, %v351
        %v353 = vrot.slane %v322, %v352
        %v354 = vlaneseq
        %v355 = vshrl.u32 %v354, 7
        %v356 = vsub.s32 2, %v355
        %v357 = vrot.slane %v322, %v356
        %v360 = vlaneseq
        %v361 = vshrl.u32 %v360, 7
        %v362 = vsub.s32 0, %v361
        %v363 = vrot.slane %v353, %v362
        %v364 = vlaneseq
        %v365 = vshrl.u32 %v364, 7
        %v366 = vsub.s32 0, %v365
        %v367 = vrot.slane %v357, %v366
        %v384 = vunpack.c.l.b16 %v329
        %v385 = vunpack.c.l.b16 %v330
        %v386 = vunpack.c.l.b16 %v331
        %v387 = vunpack.c.l.b16 %v332
        %v388 = vunpack.c.l.b16 %v333
        %v389 = vunpack.c.l.b16 %v334
        %v390 = vunpack.c.l.b16 %v335
        %v391 = vunpack.c.l.b16 %v336
        %v392 = vunpack.c.l.b16 %v337
        %v393 = vunpack.c.l.b16 %v338
        %v394 = vunpack.c.l.b16 %v339
        %v395 = vunpack.c.l.b16 %v340
        %v396 = vunpack.c.l.b16 %v341
        %v397 = vunpack.c.l.b16 %v342
        %v398 = vunpack.c.l.b16 %v343
        %v399 = vunpack.c.l.b16 %v344
        %v400 = vpack.c.b16 %v385, %v384
        %v401 = vpack.c.b16 %v387, %v386
        %v402 = vpack.c.b16 %v389, %v388
        %v403 = vpack.c.b16 %v391, %v390
        %v404 = vpack.c.b16 %v393, %v392
        %v405 = vpack.c.b16 %v395, %v394
        %v406 = vpack.c.b16 %v397, %v396
        %v407 = vpack.c.b16 %v399, %v398
        %v412 = vunpack.c.l.b16 %v345
        %v413 = vunpack.c.h.b16 %v345
        %v414 = vunpack.c.l.b16 %v346
        %v415 = vunpack.c.h.b16 %v346
        %v416 = vunpack.c.l.b16 %v347
        %v417 = vunpack.c.h.b16 %v347
        %v418 = vunpack.c.l.b16 %v348
        %v419 = vunpack.c.h.b16 %v348
        %v420 = vpack.c.b16 %v414, %v412
        %v421 = vpack.c.b16 %v415, %v413
        %v422 = vpack.c.b16 %v418, %v416
        %v423 = vpack.c.b16 %v419, %v417
        %vm428 = vcmask 261120
        %v430 = vsel %vm428, %v400, 0
        %v433 = vsel %vm428, %v401, 0
        %v436 = vsel %vm428, %v402, 0
        %v439 = vsel %vm428, %v403, 0
        %v442 = vsel %vm428, %v404, 0
        %v445 = vsel %vm428, %v405, 0
        %v448 = vsel %vm428, %v406, 0
        %v451 = vsel %vm428, %v407, 0
        %453 = vmatprep.subr.bf16.mxu0 %v421
        %454 = vmatpush1.bf16.msra.mxu0 %v420
        %455 = vmatprep.subr.bf16.mxu0 %v423
        %456 = vmatpush1.bf16.msra.mxu0 %v422
        %457 = vmatprep.subr.bf16.mxu0 0
        %458 = vmatpush1.bf16.msra.mxu0 0
        %459 = vmatprep.subr.bf16.mxu0 0
        %460 = vmatpush1.bf16.msra.mxu0 0
        %461 = vmatprep.subr.bf16.mxu0 0
        %462 = vmatpush1.bf16.msra.mxu0 0
        %463 = vmatprep.subr.bf16.mxu0 0
        %464 = vmatpush1.bf16.msra.mxu0 0
        %465 = vmatprep.subr.bf16.mxu0 0
        %466 = vmatpush1.bf16.msra.mxu0 0
        %467 = vmatprep.subr.bf16.mxu0 0
        %468 = vmatpush1.bf16.msra.mxu0 0
        %469 = vmatprep.subr.bf16.mxu0 0
        %470 = vmatpush1.bf16.msra.mxu0 0
        %471 = vmatprep.subr.bf16.mxu0 0
        %472 = vmatpush1.bf16.msra.mxu0 0
        %473 = vmatprep.subr.bf16.mxu0 0
        %474 = vmatpush1.bf16.msra.mxu0 0
        %475 = vmatprep.subr.bf16.mxu0 0
        %476 = vmatpush1.bf16.msra.mxu0 0
        %477 = vmatprep.subr.bf16.mxu0 0
        %478 = vmatpush1.bf16.msra.mxu0 0
        %479 = vmatprep.subr.bf16.mxu0 0
        %480 = vmatpush1.bf16.msra.mxu0 0
        %481 = vmatprep.subr.bf16.mxu0 0
        %482 = vmatpush1.bf16.msra.mxu0 0
        %483 = vmatprep.subr.bf16.mxu0 0
        %484 = vmatpush1.bf16.msra.mxu0 0
        %485 = vmatprep.mubr.bf16.mxu0 0
        %486 = vmatmul.mubr.bf16.gmra.mrb[0].mxu0 %v430
        %v487 = vpop.f32.mrb[0].mxu0
        %v488 = vadd.f32 %v363, %v487
        %v489 = vpop.f32.mrb[0].mxu0
        %v490 = vadd.f32 %v367, %v489
        %v491 = vpop.f32.mrb[0].mxu0
        %v492 = vadd.f32 %v363, %v491
        %v493 = vpop.f32.mrb[0].mxu0
        %v494 = vadd.f32 %v367, %v493
        %495 = vmatprep.mubr.bf16.mxu0 0
        %496 = vmatmul.mubr.bf16.gmra.mrb[0].mxu0 %v433
        %v497 = vpop.f32.mrb[0].mxu0
        %v498 = vadd.f32 %v363, %v497
        %v499 = vpop.f32.mrb[0].mxu0
        %v500 = vadd.f32 %v367, %v499
        %v501 = vpop.f32.mrb[0].mxu0
        %v502 = vadd.f32 %v363, %v501
        %v503 = vpop.f32.mrb[0].mxu0
        %v504 = vadd.f32 %v367, %v503
        %505 = vmatprep.mubr.bf16.mxu0 0
        %506 = vmatmul.mubr.bf16.gmra.mrb[0].mxu0 %v436
        %v507 = vpop.f32.mrb[0].mxu0
        %v508 = vadd.f32 %v363, %v507
        %v509 = vpop.f32.mrb[0].mxu0
        %v510 = vadd.f32 %v367, %v509
        %v511 = vpop.f32.mrb[0].mxu0
        %v512 = vadd.f32 %v363, %v511
        %v513 = vpop.f32.mrb[0].mxu0
        %v514 = vadd.f32 %v367, %v513
        %515 = vmatprep.mubr.bf16.mxu0 0
        %516 = vmatmul.mubr.bf16.gmra.mrb[0].mxu0 %v439
        %v517 = vpop.f32.mrb[0].mxu0
        %v518 = vadd.f32 %v363, %v517
        %v519 = vpop.f32.mrb[0].mxu0
        %v520 = vadd.f32 %v367, %v519
        %v521 = vpop.f32.mrb[0].mxu0
        %v522 = vadd.f32 %v363, %v521
        %v523 = vpop.f32.mrb[0].mxu0
        %v524 = vadd.f32 %v367, %v523
        %525 = vmatprep.mubr.bf16.mxu0 0
        %526 = vmatmul.mubr.bf16.gmra.mrb[0].mxu0 %v442
        %v527 = vpop.f32.mrb[0].mxu0
        %v528 = vadd.f32 %v363, %v527
        %v529 = vpop.f32.mrb[0].mxu0
        %v530 = vadd.f32 %v367, %v529
        %v531 = vpop.f32.mrb[0].mxu0
        %v532 = vadd.f32 %v363, %v531
        %v533 = vpop.f32.mrb[0].mxu0
        %v534 = vadd.f32 %v367, %v533
        %535 = vmatprep.mubr.bf16.mxu0 0
        %536 = vmatmul.mubr.bf16.gmra.mrb[0].mxu0 %v445
        %v537 = vpop.f32.mrb[0].mxu0
        %v538 = vadd.f32 %v363, %v537
        %v539 = vpop.f32.mrb[0].mxu0
        %v540 = vadd.f32 %v367, %v539
        %v541 = vpop.f32.mrb[0].mxu0
        %v542 = vadd.f32 %v363, %v541
        %v543 = vpop.f32.mrb[0].mxu0
        %v544 = vadd.f32 %v367, %v543
        %545 = vmatprep.mubr.bf16.mxu0 0
        %546 = vmatmul.mubr.bf16.gmra.mrb[0].mxu0 %v448
        %v547 = vpop.f32.mrb[0].mxu0
        %v548 = vadd.f32 %v363, %v547
        %v549 = vpop.f32.mrb[0].mxu0
        %v550 = vadd.f32 %v367, %v549
        %v551 = vpop.f32.mrb[0].mxu0
        %v552 = vadd.f32 %v363, %v551
        %v553 = vpop.f32.mrb[0].mxu0
        %v554 = vadd.f32 %v367, %v553
        %555 = vmatprep.mubr.bf16.mxu0 0
        %556 = vmatmul.mubr.bf16.gmra.mrb[0].mxu0 %v451
        %v557 = vpop.f32.mrb[0].mxu0
        %v558 = vadd.f32 %v363, %v557
        %v559 = vpop.f32.mrb[0].mxu0
        %v560 = vadd.f32 %v367, %v559
        %v561 = vpop.f32.mrb[0].mxu0
        %v562 = vadd.f32 %v363, %v561
        %v563 = vpop.f32.mrb[0].mxu0
        %v564 = vadd.f32 %v367, %v563
        %565 = vdwg.mxu0
        %v566 = vmul.f32 %v488, 0.5
        %v567 = vmul.f32 %v490, 0.5
        %v568 = vmul.f32 %v492, 0.5
        %v569 = vmul.f32 %v494, 0.5
        %v570 = vmul.f32 %v498, 0.5
        %v571 = vmul.f32 %v500, 0.5
        %v572 = vmul.f32 %v502, 0.5
        %v573 = vmul.f32 %v504, 0.5
        %v574 = vmul.f32 %v508, 0.5
        %v575 = vmul.f32 %v510, 0.5
        %v576 = vmul.f32 %v512, 0.5
        %v577 = vmul.f32 %v514, 0.5
        %v578 = vmul.f32 %v518, 0.5
        %v579 = vmul.f32 %v520, 0.5
        %v580 = vmul.f32 %v522, 0.5
        %v581 = vmul.f32 %v524, 0.5
        %v582 = vmul.f32 %v528, 0.5
        %v583 = vmul.f32 %v530, 0.5
        %v584 = vmul.f32 %v532, 0.5
        %v585 = vmul.f32 %v534, 0.5
        %v586 = vmul.f32 %v538, 0.5
        %v587 = vmul.f32 %v540, 0.5
        %v588 = vmul.f32 %v542, 0.5
        %v589 = vmul.f32 %v544, 0.5
        %v590 = vmul.f32 %v548, 0.5
        %v591 = vmul.f32 %v550, 0.5
        %v592 = vmul.f32 %v552, 0.5
        %v593 = vmul.f32 %v554, 0.5
        %v594 = vmul.f32 %v558, 0.5
        %v595 = vmul.f32 %v560, 0.5
        %v596 = vmul.f32 %v562, 0.5
        %v597 = vmul.f32 %v564, 0.5
        %v598 = vmul.f32 %v488, 0.70710677
        %v599 = vmul.f32 %v490, 0.70710677
        %v600 = vmul.f32 %v492, 0.70710677
        %v601 = vmul.f32 %v494, 0.70710677
        %v602 = vmul.f32 %v498, 0.70710677
        %v603 = vmul.f32 %v500, 0.70710677
        %v604 = vmul.f32 %v502, 0.70710677
        %v605 = vmul.f32 %v504, 0.70710677
        %v606 = vmul.f32 %v508, 0.70710677
        %v607 = vmul.f32 %v510, 0.70710677
        %v608 = vmul.f32 %v512, 0.70710677
        %v609 = vmul.f32 %v514, 0.70710677
        %v610 = vmul.f32 %v518, 0.70710677
        %v611 = vmul.f32 %v520, 0.70710677
        %v612 = vmul.f32 %v522, 0.70710677
        %v613 = vmul.f32 %v524, 0.70710677
        %v614 = vmul.f32 %v528, 0.70710677
        %v615 = vmul.f32 %v530, 0.70710677
        %v616 = vmul.f32 %v532, 0.70710677
        %v617 = vmul.f32 %v534, 0.70710677
        %v618 = vmul.f32 %v538, 0.70710677
        %v619 = vmul.f32 %v540, 0.70710677
        %v620 = vmul.f32 %v542, 0.70710677
        %v621 = vmul.f32 %v544, 0.70710677
        %v622 = vmul.f32 %v548, 0.70710677
        %v623 = vmul.f32 %v550, 0.70710677
        %v624 = vmul.f32 %v552, 0.70710677
        %v625 = vmul.f32 %v554, 0.70710677
        %v626 = vmul.f32 %v558, 0.70710677
        %v627 = vmul.f32 %v560, 0.70710677
        %v628 = vmul.f32 %v562, 0.70710677
        %v629 = vmul.f32 %v564, 0.70710677
        %v630 = verf.f32.pop %v598
        %v631 = verf.f32.pop %v599
        %v632 = verf.f32.pop %v600
        %v633 = verf.f32.pop %v601
        %v634 = verf.f32.pop %v602
        %v635 = verf.f32.pop %v603
        %v636 = verf.f32.pop %v604
        %v637 = verf.f32.pop %v605
        %v638 = verf.f32.pop %v606
        %v639 = verf.f32.pop %v607
        %v640 = verf.f32.pop %v608
        %v641 = verf.f32.pop %v609
        %v642 = verf.f32.pop %v610
        %v643 = verf.f32.pop %v611
        %v644 = verf.f32.pop %v612
        %v645 = verf.f32.pop %v613
        %v646 = verf.f32.pop %v614
        %v647 = verf.f32.pop %v615
        %v648 = verf.f32.pop %v616
        %v649 = verf.f32.pop %v617
        %v650 = verf.f32.pop %v618
        %v651 = verf.f32.pop %v619
        %v652 = verf.f32.pop %v620
        %v653 = verf.f32.pop %v621
        %v654 = verf.f32.pop %v622
        %v655 = verf.f32.pop %v623
        %v656 = verf.f32.pop %v624
        %v657 = verf.f32.pop %v625
        %v658 = verf.f32.pop %v626
        %v659 = verf.f32.pop %v627
        %v660 = verf.f32.pop %v628
        %v661 = verf.f32.pop %v629
        %v662 = vadd.f32 %v630, 1.0
        %v663 = vadd.f32 %v631, 1.0
        %v664 = vadd.f32 %v632, 1.0
        %v665 = vadd.f32 %v633, 1.0
        %v666 = vadd.f32 %v634, 1.0
        %v667 = vadd.f32 %v635, 1.0
        %v668 = vadd.f32 %v636, 1.0
        %v669 = vadd.f32 %v637, 1.0
        %v670 = vadd.f32 %v638, 1.0
        %v671 = vadd.f32 %v639, 1.0
        %v672 = vadd.f32 %v640, 1.0
        %v673 = vadd.f32 %v641, 1.0
        %v674 = vadd.f32 %v642, 1.0
        %v675 = vadd.f32 %v643, 1.0
        %v676 = vadd.f32 %v644, 1.0
        %v677 = vadd.f32 %v645, 1.0
        %v678 = vadd.f32 %v646, 1.0
        %v679 = vadd.f32 %v647, 1.0
        %v680 = vadd.f32 %v648, 1.0
        %v681 = vadd.f32 %v649, 1.0
        %v682 = vadd.f32 %v650, 1.0
        %v683 = vadd.f32 %v651, 1.0
        %v684 = vadd.f32 %v652, 1.0
        %v685 = vadd.f32 %v653, 1.0
        %v686 = vadd.f32 %v654, 1.0
        %v687 = vadd.f32 %v655, 1.0
        %v688 = vadd.f32 %v656, 1.0
        %v689 = vadd.f32 %v657, 1.0
        %v690 = vadd.f32 %v658, 1.0
        %v691 = vadd.f32 %v659, 1.0
        %v692 = vadd.f32 %v660, 1.0
        %v693 = vadd.f32 %v661, 1.0
        %v694 = vmul.f32 %v566, %v662
        %v695 = vmul.f32 %v567, %v663
        %v696 = vmul.f32 %v568, %v664
        %v697 = vmul.f32 %v569, %v665
        %v698 = vmul.f32 %v570, %v666
        %v699 = vmul.f32 %v571, %v667
        %v700 = vmul.f32 %v572, %v668
        %v701 = vmul.f32 %v573, %v669
        %v702 = vmul.f32 %v574, %v670
        %v703 = vmul.f32 %v575, %v671
        %v704 = vmul.f32 %v576, %v672
        %v705 = vmul.f32 %v577, %v673
        %v706 = vmul.f32 %v578, %v674
        %v707 = vmul.f32 %v579, %v675
        %v708 = vmul.f32 %v580, %v676
        %v709 = vmul.f32 %v581, %v677
        %v710 = vmul.f32 %v582, %v678
        %v711 = vmul.f32 %v583, %v679
        %v712 = vmul.f32 %v584, %v680
        %v713 = vmul.f32 %v585, %v681
        %v714 = vmul.f32 %v586, %v682
        %v715 = vmul.f32 %v587, %v683
        %v716 = vmul.f32 %v588, %v684
        %v717 = vmul.f32 %v589, %v685
        %v718 = vmul.f32 %v590, %v686
        %v719 = vmul.f32 %v591, %v687
        %v720 = vmul.f32 %v592, %v688
        %v721 = vmul.f32 %v593, %v689
        %v722 = vmul.f32 %v594, %v690
        %v723 = vmul.f32 %v595, %v691
        %v724 = vmul.f32 %v596, %v692
        %v725 = vmul.f32 %v597, %v693
        %v726 = vpack.c.bf16 %v696, %v694
        %v727 = vpack.c.bf16 %v697, %v695
        %v728 = vpack.c.bf16 %v700, %v698
        %v729 = vpack.c.bf16 %v701, %v699
        %v730 = vpack.c.bf16 %v704, %v702
        %v731 = vpack.c.bf16 %v705, %v703
        %v732 = vpack.c.bf16 %v708, %v706
        %v733 = vpack.c.bf16 %v709, %v707
        %v734 = vpack.c.bf16 %v712, %v710
        %v735 = vpack.c.bf16 %v713, %v711
        %v736 = vpack.c.bf16 %v716, %v714
        %v737 = vpack.c.bf16 %v717, %v715
        %v738 = vpack.c.bf16 %v720, %v718
        %v739 = vpack.c.bf16 %v721, %v719
        %v740 = vpack.c.bf16 %v724, %v722
        %v741 = vpack.c.bf16 %v725, %v723
        %v742 = vld [vmem:[#allocation2] sm:$0xff]
        %v743 = vld [vmem:[#allocation2 + $0x8] sm:$0xff]
        %v744 = vld [vmem:[#allocation2 + $0x10] sm:$0xff]
        %v745 = vld [vmem:[#allocation2 + $0x18] sm:$0xff]
        %v746 = vld [vmem:[#allocation2 + $0x20] sm:$0xff]
        %v747 = vld [vmem:[#allocation2 + $0x28] sm:$0xff]
        %v748 = vld [vmem:[#allocation2 + $0x30] sm:$0xff]
        %v749 = vld [vmem:[#allocation2 + $0x38] sm:$0xff]
        %v750 = vld [vmem:[#allocation2 + $0x40] sm:$0xff]
        %v751 = vld [vmem:[#allocation2 + $0x48] sm:$0xff]
        %v752 = vld [vmem:[#allocation2 + $0x50] sm:$0xff]
        %v753 = vld [vmem:[#allocation2 + $0x58] sm:$0xff]
        %v754 = vld [vmem:[#allocation2 + $0x60] sm:$0xff]
        %v755 = vld [vmem:[#allocation2 + $0x68] sm:$0xff]
        %v756 = vld [vmem:[#allocation2 + $0x70] sm:$0xff]
        %v757 = vld [vmem:[#allocation2 + $0x78] sm:$0xff]
        %v758 = vld [vmem:[#allocation2 + $0x80] sm:$0xff]
        %v759 = vld [vmem:[#allocation2 + $0x88] sm:$0xff]
        %v760 = vld [vmem:[#allocation2 + $0x90] sm:$0xff]
        %v761 = vld [vmem:[#allocation2 + $0x98] sm:$0xff]
        %v762 = vld [vmem:[#allocation2 + $0xa0] sm:$0xff]
        %v763 = vld [vmem:[#allocation2 + $0xa8] sm:$0xff]
        %v764 = vld [vmem:[#allocation2 + $0xb0] sm:$0xff]
        %v765 = vld [vmem:[#allocation2 + $0xb8] sm:$0xff]
        %v766 = vld [vmem:[#allocation2 + $0xc0] sm:$0xff]
        %v767 = vld [vmem:[#allocation2 + $0xc8] sm:$0xff]
        %v768 = vld [vmem:[#allocation2 + $0xd0] sm:$0xff]
        %v769 = vld [vmem:[#allocation2 + $0xd8] sm:$0xff]
        %v770 = vld [vmem:[#allocation2 + $0xe0] sm:$0xff]
        %v771 = vld [vmem:[#allocation2 + $0xe8] sm:$0xff]
        %v772 = vld [vmem:[#allocation2 + $0xf0] sm:$0xff]
        %v773 = vld [vmem:[#allocation2 + $0xf8] sm:$0xff]
        %v775 = vlaneseq
        %v776 = vshrl.u32 %v775, 7
        %v777 = vsub.s32 0, %v776
        %v778 = vrot.slane %v324, %v777
        %v779 = vlaneseq
        %v780 = vshrl.u32 %v779, 7
        %v781 = vsub.s32 2, %v780
        %v782 = vrot.slane %v324, %v781
        %v785 = vlaneseq
        %v786 = vshrl.u32 %v785, 7
        %v787 = vsub.s32 0, %v786
        %v788 = vrot.slane %v778, %v787
        %v789 = vlaneseq
        %v790 = vshrl.u32 %v789, 7
        %v791 = vsub.s32 0, %v790
        %v792 = vrot.slane %v782, %v791
        %v825 = vunpack.c.l.b16 %v742
        %v826 = vunpack.c.h.b16 %v742
        %v827 = vunpack.c.l.b16 %v743
        %v828 = vunpack.c.h.b16 %v743
        %v829 = vunpack.c.l.b16 %v744
        %v830 = vunpack.c.h.b16 %v744
        %v831 = vunpack.c.l.b16 %v745
        %v832 = vunpack.c.h.b16 %v745
        %v833 = vunpack.c.l.b16 %v746
        %v834 = vunpack.c.h.b16 %v746
        %v835 = vunpack.c.l.b16 %v747
        %v836 = vunpack.c.h.b16 %v747
        %v837 = vunpack.c.l.b16 %v748
        %v838 = vunpack.c.h.b16 %v748
        %v839 = vunpack.c.l.b16 %v749
        %v840 = vunpack.c.h.b16 %v749
        %v841 = vunpack.c.l.b16 %v750
        %v842 = vunpack.c.h.b16 %v750
        %v843 = vunpack.c.l.b16 %v751
        %v844 = vunpack.c.h.b16 %v751
        %v845 = vunpack.c.l.b16 %v752
        %v846 = vunpack.c.h.b16 %v752
        %v847 = vunpack.c.l.b16 %v753
        %v848 = vunpack.c.h.b16 %v753
        %v849 = vunpack.c.l.b16 %v754
        %v850 = vunpack.c.h.b16 %v754
        %v851 = vunpack.c.l.b16 %v755
        %v852 = vunpack.c.h.b16 %v755
        %v853 = vunpack.c.l.b16 %v756
        %v854 = vunpack.c.h.b16 %v756
        %v855 = vunpack.c.l.b16 %v757
        %v856 = vunpack.c.h.b16 %v757
        %v857 = vunpack.c.l.b16 %v758
        %v858 = vunpack.c.h.b16 %v758
        %v859 = vunpack.c.l.b16 %v759
        %v860 = vunpack.c.h.b16 %v759
        %v861 = vunpack.c.l.b16 %v760
        %v862 = vunpack.c.h.b16 %v760
        %v863 = vunpack.c.l.b16 %v761
        %v864 = vunpack.c.h.b16 %v761
        %v865 = vunpack.c.l.b16 %v762
        %v866 = vunpack.c.h.b16 %v762
        %v867 = vunpack.c.l.b16 %v763
        %v868 = vunpack.c.h.b16 %v763
        %v869 = vunpack.c.l.b16 %v764
        %v870 = vunpack.c.h.b16 %v764
        %v871 = vunpack.c.l.b16 %v765
        %v872 = vunpack.c.h.b16 %v765
        %v873 = vunpack.c.l.b16 %v766
        %v874 = vunpack.c.h.b16 %v766
        %v875 = vunpack.c.l.b16 %v767
        %v876 = vunpack.c.h.b16 %v767
        %v877 = vunpack.c.l.b16 %v768
        %v878 = vunpack.c.h.b16 %v768
        %v879 = vunpack.c.l.b16 %v769
        %v880 = vunpack.c.h.b16 %v769
        %v881 = vunpack.c.l.b16 %v770
        %v882 = vunpack.c.h.b16 %v770
        %v883 = vunpack.c.l.b16 %v771
        %v884 = vunpack.c.h.b16 %v771
        %v885 = vunpack.c.l.b16 %v772
        %v886 = vunpack.c.h.b16 %v772
        %v887 = vunpack.c.l.b16 %v773
        %v888 = vunpack.c.h.b16 %v773
        %v889 = vpack.c.b16 %v827, %v825
        %v890 = vpack.c.b16 %v828, %v826
        %v891 = vpack.c.b16 %v831, %v829
        %v892 = vpack.c.b16 %v832, %v830
        %v893 = vpack.c.b16 %v835, %v833
        %v894 = vpack.c.b16 %v836, %v834
        %v895 = vpack.c.b16 %v839, %v837
        %v896 = vpack.c.b16 %v840, %v838
        %v897 = vpack.c.b16 %v843, %v841
        %v898 = vpack.c.b16 %v844, %v842
        %v899 = vpack.c.b16 %v847, %v845
        %v900 = vpack.c.b16 %v848, %v846
        %v901 = vpack.c.b16 %v851, %v849
        %v902 = vpack.c.b16 %v852, %v850
        %v903 = vpack.c.b16 %v855, %v853
        %v904 = vpack.c.b16 %v856, %v854
        %v905 = vpack.c.b16 %v859, %v857
        %v906 = vpack.c.b16 %v860, %v858
        %v907 = vpack.c.b16 %v863, %v861
        %v908 = vpack.c.b16 %v864, %v862
        %v909 = vpack.c.b16 %v867, %v865
        %v910 = vpack.c.b16 %v868, %v866
        %v911 = vpack.c.b16 %v871, %v869
        %v912 = vpack.c.b16 %v872, %v870
        %v913 = vpack.c.b16 %v875, %v873
        %v914 = vpack.c.b16 %v876, %v874
        %v915 = vpack.c.b16 %v879, %v877
        %v916 = vpack.c.b16 %v880, %v878
        %v917 = vpack.c.b16 %v883, %v881
        %v918 = vpack.c.b16 %v884, %v882
        %v919 = vpack.c.b16 %v887, %v885
        %v920 = vpack.c.b16 %v888, %v886
        %953 = vmatprep.subr.bf16.mxu0 %v890
        %954 = vmatpush1.bf16.msra.mxu0 %v889
        %955 = vmatprep.subr.bf16.mxu0 %v892
        %956 = vmatpush1.bf16.msra.mxu0 %v891
        %957 = vmatprep.subr.bf16.mxu0 %v894
        %958 = vmatpush1.bf16.msra.mxu0 %v893
        %959 = vmatprep.subr.bf16.mxu0 %v896
        %960 = vmatpush1.bf16.msra.mxu0 %v895
        %961 = vmatprep.subr.bf16.mxu0 %v898
        %962 = vmatpush1.bf16.msra.mxu0 %v897
        %963 = vmatprep.subr.bf16.mxu0 %v900
        %964 = vmatpush1.bf16.msra.mxu0 %v899
        %965 = vmatprep.subr.bf16.mxu0 %v902
        %966 = vmatpush1.bf16.msra.mxu0 %v901
        %967 = vmatprep.subr.bf16.mxu0 %v904
        %968 = vmatpush1.bf16.msra.mxu0 %v903
        %969 = vmatprep.subr.bf16.mxu0 %v906
        %970 = vmatpush1.bf16.msra.mxu0 %v905
        %971 = vmatprep.subr.bf16.mxu0 %v908
        %972 = vmatpush1.bf16.msra.mxu0 %v907
        %973 = vmatprep.subr.bf16.mxu0 %v910
        %974 = vmatpush1.bf16.msra.mxu0 %v909
        %975 = vmatprep.subr.bf16.mxu0 %v912
        %976 = vmatpush1.bf16.msra.mxu0 %v911
        %977 = vmatprep.subr.bf16.mxu0 %v914
        %978 = vmatpush1.bf16.msra.mxu0 %v913
        %979 = vmatprep.subr.bf16.mxu0 %v916
        %980 = vmatpush1.bf16.msra.mxu0 %v915
        %981 = vmatprep.subr.bf16.mxu0 %v918
        %982 = vmatpush1.bf16.msra.mxu0 %v917
        %983 = vmatprep.subr.bf16.mxu0 %v920
        %984 = vmatpush1.bf16.msra.mxu0 %v919
        %985 = vmatprep.mubr.bf16.mxu0 %v727
        %986 = vmatmul.mubr.bf16.gmra.mrb[0].mxu0 %v726
        %v987 = vpop.f32.mrb[0].mxu0
        %v988 = vadd.f32 %v788, %v987
        %v989 = vpop.f32.mrb[0].mxu0
        %v990 = vadd.f32 %v792, %v989
        %v991 = vpop.f32.mrb[0].mxu0
        %v992 = vadd.f32 %v788, %v991
        %v993 = vpop.f32.mrb[0].mxu0
        %v994 = vadd.f32 %v792, %v993
        %995 = vmatprep.mubr.bf16.mxu0 %v729
        %996 = vmatmul.mubr.bf16.gmra.mrb[0].mxu0 %v728
        %v997 = vpop.f32.mrb[0].mxu0
        %v998 = vadd.f32 %v788, %v997
        %v999 = vpop.f32.mrb[0].mxu0
        %v1000 = vadd.f32 %v792, %v999
        %v1001 = vpop.f32.mrb[0].mxu0
        %v1002 = vadd.f32 %v788, %v1001
        %v1003 = vpop.f32.mrb[0].mxu0
        %v1004 = vadd.f32 %v792, %v1003
        %1005 = vmatprep.mubr.bf16.mxu0 %v731
        %1006 = vmatmul.mubr.bf16.gmra.mrb[0].mxu0 %v730
        %v1007 = vpop.f32.mrb[0].mxu0
        %v1008 = vadd.f32 %v788, %v1007
        %v1009 = vpop.f32.mrb[0].mxu0
        %v1010 = vadd.f32 %v792, %v1009
        %v1011 = vpop.f32.mrb[0].mxu0
        %v1012 = vadd.f32 %v788, %v1011
        %v1013 = vpop.f32.mrb[0].mxu0
        %v1014 = vadd.f32 %v792, %v1013
        %1015 = vmatprep.mubr.bf16.mxu0 %v733
        %1016 = vmatmul.mubr.bf16.gmra.mrb[0].mxu0 %v732
        %v1017 = vpop.f32.mrb[0].mxu0
        %v1018 = vadd.f32 %v788, %v1017
        %v1019 = vpop.f32.mrb[0].mxu0
        %v1020 = vadd.f32 %v792, %v1019
        %v1021 = vpop.f32.mrb[0].mxu0
        %v1022 = vadd.f32 %v788, %v1021
        %v1023 = vpop.f32.mrb[0].mxu0
        %v1024 = vadd.f32 %v792, %v1023
        %1025 = vmatprep.mubr.bf16.mxu0 %v735
        %1026 = vmatmul.mubr.bf16.gmra.mrb[0].mxu0 %v734
        %v1027 = vpop.f32.mrb[0].mxu0
        %v1028 = vadd.f32 %v788, %v1027
        %v1029 = vpop.f32.mrb[0].mxu0
        %v1030 = vadd.f32 %v792, %v1029
        %v1031 = vpop.f32.mrb[0].mxu0
        %v1032 = vadd.f32 %v788, %v1031
        %v1033 = vpop.f32.mrb[0].mxu0
        %v1034 = vadd.f32 %v792, %v1033
        %1035 = vmatprep.mubr.bf16.mxu0 %v737
        %1036 = vmatmul.mubr.bf16.gmra.mrb[0].mxu0 %v736
        %v1037 = vpop.f32.mrb[0].mxu0
        %v1038 = vadd.f32 %v788, %v1037
        %v1039 = vpop.f32.mrb[0].mxu0
        %v1040 = vadd.f32 %v792, %v1039
        %v1041 = vpop.f32.mrb[0].mxu0
        %v1042 = vadd.f32 %v788, %v1041
        %v1043 = vpop.f32.mrb[0].mxu0
        %v1044 = vadd.f32 %v792, %v1043
        %1045 = vmatprep.mubr.bf16.mxu0 %v739
        %1046 = vmatmul.mubr.bf16.gmra.mrb[0].mxu0 %v738
        %v1047 = vpop.f32.mrb[0].mxu0
        %v1048 = vadd.f32 %v788, %v1047
        %v1049 = vpop.f32.mrb[0].mxu0
        %v1050 = vadd.f32 %v792, %v1049
        %v1051 = vpop.f32.mrb[0].mxu0
        %v1052 = vadd.f32 %v788, %v1051
        %v1053 = vpop.f32.mrb[0].mxu0
        %v1054 = vadd.f32 %v792, %v1053
        %1055 = vmatprep.mubr.bf16.mxu0 %v741
        %1056 = vmatmul.mubr.bf16.gmra.mrb[0].mxu0 %v740
        %v1057 = vpop.f32.mrb[0].mxu0
        %v1058 = vadd.f32 %v788, %v1057
        %v1059 = vpop.f32.mrb[0].mxu0
        %v1060 = vadd.f32 %v792, %v1059
        %v1061 = vpop.f32.mrb[0].mxu0
        %v1062 = vadd.f32 %v788, %v1061
        %v1063 = vpop.f32.mrb[0].mxu0
        %v1064 = vadd.f32 %v792, %v1063
        %1065 = vdwg.mxu0
        %v1066 = vadd.f32 %v988, %v488
        %v1067 = vadd.f32 %v990, %v490
        %v1068 = vadd.f32 %v992, %v492
        %v1069 = vadd.f32 %v994, %v494
        %v1070 = vadd.f32 %v998, %v498
        %v1071 = vadd.f32 %v1000, %v500
        %v1072 = vadd.f32 %v1002, %v502
        %v1073 = vadd.f32 %v1004, %v504
        %v1074 = vadd.f32 %v1008, %v508
        %v1075 = vadd.f32 %v1010, %v510
        %v1076 = vadd.f32 %v1012, %v512
        %v1077 = vadd.f32 %v1014, %v514
        %v1078 = vadd.f32 %v1018, %v518
        %v1079 = vadd.f32 %v1020, %v520
        %v1080 = vadd.f32 %v1022, %v522
        %v1081 = vadd.f32 %v1024, %v524
        %v1082 = vadd.f32 %v1028, %v528
        %v1083 = vadd.f32 %v1030, %v530
        %v1084 = vadd.f32 %v1032, %v532
        %v1085 = vadd.f32 %v1034, %v534
        %v1086 = vadd.f32 %v1038, %v538
        %v1087 = vadd.f32 %v1040, %v540
        %v1088 = vadd.f32 %v1042, %v542
        %v1089 = vadd.f32 %v1044, %v544
        %v1090 = vadd.f32 %v1048, %v548
        %v1091 = vadd.f32 %v1050, %v550
        %v1092 = vadd.f32 %v1052, %v552
        %v1093 = vadd.f32 %v1054, %v554
        %v1094 = vadd.f32 %v1058, %v558
        %v1095 = vadd.f32 %v1060, %v560
        %v1096 = vadd.f32 %v1062, %v562
        %v1097 = vadd.f32 %v1064, %v564
        %v1098 = vadd.f32 %v1066, %v1067
        %1099 = vadd.xlane.f32.xlu0 %v1098
        %v1100 = vpop.xlane.xlu0 %1099
        %v1101 = vadd.f32 %v1068, %v1069
        %1102 = vadd.xlane.f32.xlu0 %v1101
        %v1103 = vpop.xlane.xlu0 %1102
        %v1104 = vadd.f32 %v1070, %v1071
        %1105 = vadd.xlane.f32.xlu0 %v1104
        %v1106 = vpop.xlane.xlu0 %1105
        %v1107 = vadd.f32 %v1072, %v1073
        %1108 = vadd.xlane.f32.xlu0 %v1107
        %v1109 = vpop.xlane.xlu0 %1108
        %v1110 = vadd.f32 %v1074, %v1075
        %1111 = vadd.xlane.f32.xlu0 %v1110
        %v1112 = vpop.xlane.xlu0 %1111
        %v1113 = vadd.f32 %v1076, %v1077
        %1114 = vadd.xlane.f32.xlu0 %v1113
        %v1115 = vpop.xlane.xlu0 %1114
        %v1116 = vadd.f32 %v1078, %v1079
        %1117 = vadd.xlane.f32.xlu0 %v1116
        %v1118 = vpop.xlane.xlu0 %1117
        %v1119 = vadd.f32 %v1080, %v1081
        %1120 = vadd.xlane.f32.xlu0 %v1119
        %v1121 = vpop.xlane.xlu0 %1120
        %v1122 = vadd.f32 %v1082, %v1083
        %1123 = vadd.xlane.f32.xlu0 %v1122
        %v1124 = vpop.xlane.xlu0 %1123
        %v1125 = vadd.f32 %v1084, %v1085
        %1126 = vadd.xlane.f32.xlu0 %v1125
        %v1127 = vpop.xlane.xlu0 %1126
        %v1128 = vadd.f32 %v1086, %v1087
        %1129 = vadd.xlane.f32.xlu0 %v1128
        %v1130 = vpop.xlane.xlu0 %1129
        %v1131 = vadd.f32 %v1088, %v1089
        %1132 = vadd.xlane.f32.xlu0 %v1131
        %v1133 = vpop.xlane.xlu0 %1132
        %v1134 = vadd.f32 %v1090, %v1091
        %1135 = vadd.xlane.f32.xlu0 %v1134
        %v1136 = vpop.xlane.xlu0 %1135
        %v1137 = vadd.f32 %v1092, %v1093
        %1138 = vadd.xlane.f32.xlu0 %v1137
        %v1139 = vpop.xlane.xlu0 %1138
        %v1140 = vadd.f32 %v1094, %v1095
        %1141 = vadd.xlane.f32.xlu0 %v1140
        %v1142 = vpop.xlane.xlu0 %1141
        %v1143 = vadd.f32 %v1096, %v1097
        %1144 = vadd.xlane.f32.xlu0 %v1143
        %v1145 = vpop.xlane.xlu0 %1144
        %v1146 = vrcp.pop 256.0
        %v1147 = vmul.f32 %v1100, %v1146
        %v1148 = vmul.f32 %v1103, %v1146
        %v1149 = vmul.f32 %v1106, %v1146
        %v1150 = vmul.f32 %v1109, %v1146
        %v1151 = vmul.f32 %v1112, %v1146
        %v1152 = vmul.f32 %v1115, %v1146
        %v1153 = vmul.f32 %v1118, %v1146
        %v1154 = vmul.f32 %v1121, %v1146
        %v1155 = vmul.f32 %v1124, %v1146
        %v1156 = vmul.f32 %v1127, %v1146
        %v1157 = vmul.f32 %v1130, %v1146
        %v1158 = vmul.f32 %v1133, %v1146
        %v1159 = vmul.f32 %v1136, %v1146
        %v1160 = vmul.f32 %v1139, %v1146
        %v1161 = vmul.f32 %v1142, %v1146
        %v1162 = vmul.f32 %v1145, %v1146
        %v1163 = vsub.f32 %v1066, %v1147
        %v1164 = vsub.f32 %v1067, %v1147
        %v1165 = vsub.f32 %v1068, %v1148
        %v1166 = vsub.f32 %v1069, %v1148
        %v1167 = vsub.f32 %v1070, %v1149
        %v1168 = vsub.f32 %v1071, %v1149
        %v1169 = vsub.f32 %v1072, %v1150
        %v1170 = vsub.f32 %v1073, %v1150
        %v1171 = vsub.f32 %v1074, %v1151
        %v1172 = vsub.f32 %v1075, %v1151
        %v1173 = vsub.f32 %v1076, %v1152
        %v1174 = vsub.f32 %v1077, %v1152
        %v1175 = vsub.f32 %v1078, %v1153
        %v1176 = vsub.f32 %v1079, %v1153
        %v1177 = vsub.f32 %v1080, %v1154
        %v1178 = vsub.f32 %v1081, %v1154
        %v1179 = vsub.f32 %v1082, %v1155
        %v1180 = vsub.f32 %v1083, %v1155
        %v1181 = vsub.f32 %v1084, %v1156
        %v1182 = vsub.f32 %v1085, %v1156
        %v1183 = vsub.f32 %v1086, %v1157
        %v1184 = vsub.f32 %v1087, %v1157
        %v1185 = vsub.f32 %v1088, %v1158
        %v1186 = vsub.f32 %v1089, %v1158
        %v1187 = vsub.f32 %v1090, %v1159
        %v1188 = vsub.f32 %v1091, %v1159
        %v1189 = vsub.f32 %v1092, %v1160
        %v1190 = vsub.f32 %v1093, %v1160
        %v1191 = vsub.f32 %v1094, %v1161
        %v1192 = vsub.f32 %v1095, %v1161
        %v1193 = vsub.f32 %v1096, %v1162
        %v1194 = vsub.f32 %v1097, %v1162
        %v1195 = vmul.f32 %v1163, %v1163
        %v1196 = vmul.f32 %v1164, %v1164
        %v1197 = vmul.f32 %v1165, %v1165
        %v1198 = vmul.f32 %v1166, %v1166
        %v1199 = vmul.f32 %v1167, %v1167
        %v1200 = vmul.f32 %v1168, %v1168
        %v1201 = vmul.f32 %v1169, %v1169
        %v1202 = vmul.f32 %v1170, %v1170
        %v1203 = vmul.f32 %v1171, %v1171
        %v1204 = vmul.f32 %v1172, %v1172
        %v1205 = vmul.f32 %v1173, %v1173
        %v1206 = vmul.f32 %v1174, %v1174
        %v1207 = vmul.f32 %v1175, %v1175
        %v1208 = vmul.f32 %v1176, %v1176
        %v1209 = vmul.f32 %v1177, %v1177
        %v1210 = vmul.f32 %v1178, %v1178
        %v1211 = vmul.f32 %v1179, %v1179
        %v1212 = vmul.f32 %v1180, %v1180
        %v1213 = vmul.f32 %v1181, %v1181
        %v1214 = vmul.f32 %v1182, %v1182
        %v1215 = vmul.f32 %v1183, %v1183
        %v1216 = vmul.f32 %v1184, %v1184
        %v1217 = vmul.f32 %v1185, %v1185
        %v1218 = vmul.f32 %v1186, %v1186
        %v1219 = vmul.f32 %v1187, %v1187
        %v1220 = vmul.f32 %v1188, %v1188
        %v1221 = vmul.f32 %v1189, %v1189
        %v1222 = vmul.f32 %v1190, %v1190
        %v1223 = vmul.f32 %v1191, %v1191
        %v1224 = vmul.f32 %v1192, %v1192
        %v1225 = vmul.f32 %v1193, %v1193
        %v1226 = vmul.f32 %v1194, %v1194
        %v1227 = vadd.f32 %v1195, %v1196
        %1228 = vadd.xlane.f32.xlu0 %v1227
        %v1229 = vpop.xlane.xlu0 %1228
        %v1230 = vadd.f32 %v1197, %v1198
        %1231 = vadd.xlane.f32.xlu0 %v1230
        %v1232 = vpop.xlane.xlu0 %1231
        %v1233 = vadd.f32 %v1199, %v1200
        %1234 = vadd.xlane.f32.xlu0 %v1233
        %v1235 = vpop.xlane.xlu0 %1234
        %v1236 = vadd.f32 %v1201, %v1202
        %1237 = vadd.xlane.f32.xlu0 %v1236
        %v1238 = vpop.xlane.xlu0 %1237
        %v1239 = vadd.f32 %v1203, %v1204
        %1240 = vadd.xlane.f32.xlu0 %v1239
        %v1241 = vpop.xlane.xlu0 %1240
        %v1242 = vadd.f32 %v1205, %v1206
        %1243 = vadd.xlane.f32.xlu0 %v1242
        %v1244 = vpop.xlane.xlu0 %1243
        %v1245 = vadd.f32 %v1207, %v1208
        %1246 = vadd.xlane.f32.xlu0 %v1245
        %v1247 = vpop.xlane.xlu0 %1246
        %v1248 = vadd.f32 %v1209, %v1210
        %1249 = vadd.xlane.f32.xlu0 %v1248
        %v1250 = vpop.xlane.xlu0 %1249
        %v1251 = vadd.f32 %v1211, %v1212
        %1252 = vadd.xlane.f32.xlu0 %v1251
        %v1253 = vpop.xlane.xlu0 %1252
        %v1254 = vadd.f32 %v1213, %v1214
        %1255 = vadd.xlane.f32.xlu0 %v1254
        %v1256 = vpop.xlane.xlu0 %1255
        %v1257 = vadd.f32 %v1215, %v1216
        %1258 = vadd.xlane.f32.xlu0 %v1257
        %v1259 = vpop.xlane.xlu0 %1258
        %v1260 = vadd.f32 %v1217, %v1218
        %1261 = vadd.xlane.f32.xlu0 %v1260
        %v1262 = vpop.xlane.xlu0 %1261
        %v1263 = vadd.f32 %v1219, %v1220
        %1264 = vadd.xlane.f32.xlu0 %v1263
        %v1265 = vpop.xlane.xlu0 %1264
        %v1266 = vadd.f32 %v1221, %v1222
        %1267 = vadd.xlane.f32.xlu0 %v1266
        %v1268 = vpop.xlane.xlu0 %1267
        %v1269 = vadd.f32 %v1223, %v1224
        %1270 = vadd.xlane.f32.xlu0 %v1269
        %v1271 = vpop.xlane.xlu0 %1270
        %v1272 = vadd.f32 %v1225, %v1226
        %1273 = vadd.xlane.f32.xlu0 %v1272
        %v1274 = vpop.xlane.xlu0 %1273
        %v1275 = vmul.f32 %v1229, %v1146
        %v1276 = vmul.f32 %v1232, %v1146
        %v1277 = vmul.f32 %v1235, %v1146
        %v1278 = vmul.f32 %v1238, %v1146
        %v1279 = vmul.f32 %v1241, %v1146
        %v1280 = vmul.f32 %v1244, %v1146
        %v1281 = vmul.f32 %v1247, %v1146
        %v1282 = vmul.f32 %v1250, %v1146
        %v1283 = vmul.f32 %v1253, %v1146
        %v1284 = vmul.f32 %v1256, %v1146
        %v1285 = vmul.f32 %v1259, %v1146
        %v1286 = vmul.f32 %v1262, %v1146
        %v1287 = vmul.f32 %v1265, %v1146
        %v1288 = vmul.f32 %v1268, %v1146
        %v1289 = vmul.f32 %v1271, %v1146
        %v1290 = vmul.f32 %v1274, %v1146
        %v1291 = vadd.f32 %v1275, 1e-05
        %v1292 = vadd.f32 %v1276, 1e-05
        %v1293 = vadd.f32 %v1277, 1e-05
        %v1294 = vadd.f32 %v1278, 1e-05
        %v1295 = vadd.f32 %v1279, 1e-05
        %v1296 = vadd.f32 %v1280, 1e-05
        %v1297 = vadd.f32 %v1281, 1e-05
        %v1298 = vadd.f32 %v1282, 1e-05
        %v1299 = vadd.f32 %v1283, 1e-05
        %v1300 = vadd.f32 %v1284, 1e-05
        %v1301 = vadd.f32 %v1285, 1e-05
        %v1302 = vadd.f32 %v1286, 1e-05
        %v1303 = vadd.f32 %v1287, 1e-05
        %v1304 = vadd.f32 %v1288, 1e-05
        %v1305 = vadd.f32 %v1289, 1e-05
        %v1306 = vadd.f32 %v1290, 1e-05
        %v1307 = vrsqrt.pop %v1291
        %v1308 = vrsqrt.pop %v1292
        %v1309 = vrsqrt.pop %v1293
        %v1310 = vrsqrt.pop %v1294
        %v1311 = vrsqrt.pop %v1295
        %v1312 = vrsqrt.pop %v1296
        %v1313 = vrsqrt.pop %v1297
        %v1314 = vrsqrt.pop %v1298
        %v1315 = vrsqrt.pop %v1299
        %v1316 = vrsqrt.pop %v1300
        %v1317 = vrsqrt.pop %v1301
        %v1318 = vrsqrt.pop %v1302
        %v1319 = vrsqrt.pop %v1303
        %v1320 = vrsqrt.pop %v1304
        %v1321 = vrsqrt.pop %v1305
        %v1322 = vrsqrt.pop %v1306
        %v1323 = vmul.f32 %v1163, %v1307
        %v1324 = vmul.f32 %v1164, %v1307
        %v1325 = vmul.f32 %v1165, %v1308
        %v1326 = vmul.f32 %v1166, %v1308
        %v1327 = vmul.f32 %v1167, %v1309
        %v1328 = vmul.f32 %v1168, %v1309
        %v1329 = vmul.f32 %v1169, %v1310
        %v1330 = vmul.f32 %v1170, %v1310
        %v1331 = vmul.f32 %v1171, %v1311
        %v1332 = vmul.f32 %v1172, %v1311
        %v1333 = vmul.f32 %v1173, %v1312
        %v1334 = vmul.f32 %v1174, %v1312
        %v1335 = vmul.f32 %v1175, %v1313
        %v1336 = vmul.f32 %v1176, %v1313
        %v1337 = vmul.f32 %v1177, %v1314
        %v1338 = vmul.f32 %v1178, %v1314
        %v1339 = vmul.f32 %v1179, %v1315
        %v1340 = vmul.f32 %v1180, %v1315
        %v1341 = vmul.f32 %v1181, %v1316
        %v1342 = vmul.f32 %v1182, %v1316
        %v1343 = vmul.f32 %v1183, %v1317
        %v1344 = vmul.f32 %v1184, %v1317
        %v1345 = vmul.f32 %v1185, %v1318
        %v1346 = vmul.f32 %v1186, %v1318
        %v1347 = vmul.f32 %v1187, %v1319
        %v1348 = vmul.f32 %v1188, %v1319
        %v1349 = vmul.f32 %v1189, %v1320
        %v1350 = vmul.f32 %v1190, %v1320
        %v1351 = vmul.f32 %v1191, %v1321
        %v1352 = vmul.f32 %v1192, %v1321
        %v1353 = vmul.f32 %v1193, %v1322
        %v1354 = vmul.f32 %v1194, %v1322
        %v1356 = vlaneseq
        %v1357 = vshrl.u32 %v1356, 7
        %v1358 = vsub.s32 0, %v1357
        %v1359 = vrot.slane %v326, %v1358
        %v1360 = vlaneseq
        %v1361 = vshrl.u32 %v1360, 7
        %v1362 = vsub.s32 2, %v1361
        %v1363 = vrot.slane %v326, %v1362
        %v1366 = vlaneseq
        %v1367 = vshrl.u32 %v1366, 7
        %v1368 = vsub.s32 0, %v1367
        %v1369 = vrot.slane %v1359, %v1368
        %v1370 = vlaneseq
        %v1371 = vshrl.u32 %v1370, 7
        %v1372 = vsub.s32 0, %v1371
        %v1373 = vrot.slane %v1363, %v1372
        %v1374 = vmul.f32 %v1323, %v1369
        %v1375 = vmul.f32 %v1324, %v1373
        %v1376 = vmul.f32 %v1325, %v1369
        %v1377 = vmul.f32 %v1326, %v1373
        %v1378 = vmul.f32 %v1327, %v1369
        %v1379 = vmul.f32 %v1328, %v1373
        %v1380 = vmul.f32 %v1329, %v1369
        %v1381 = vmul.f32 %v1330, %v1373
        %v1382 = vmul.f32 %v1331, %v1369
        %v1383 = vmul.f32 %v1332, %v1373
        %v1384 = vmul.f32 %v1333, %v1369
        %v1385 = vmul.f32 %v1334, %v1373
        %v1386 = vmul.f32 %v1335, %v1369
        %v1387 = vmul.f32 %v1336, %v1373
        %v1388 = vmul.f32 %v1337, %v1369
        %v1389 = vmul.f32 %v1338, %v1373
        %v1390 = vmul.f32 %v1339, %v1369
        %v1391 = vmul.f32 %v1340, %v1373
        %v1392 = vmul.f32 %v1341, %v1369
        %v1393 = vmul.f32 %v1342, %v1373
        %v1394 = vmul.f32 %v1343, %v1369
        %v1395 = vmul.f32 %v1344, %v1373
        %v1396 = vmul.f32 %v1345, %v1369
        %v1397 = vmul.f32 %v1346, %v1373
        %v1398 = vmul.f32 %v1347, %v1369
        %v1399 = vmul.f32 %v1348, %v1373
        %v1400 = vmul.f32 %v1349, %v1369
        %v1401 = vmul.f32 %v1350, %v1373
        %v1402 = vmul.f32 %v1351, %v1369
        %v1403 = vmul.f32 %v1352, %v1373
        %v1404 = vmul.f32 %v1353, %v1369
        %v1405 = vmul.f32 %v1354, %v1373
        %v1407 = vlaneseq
        %v1408 = vshrl.u32 %v1407, 7
        %v1409 = vsub.s32 0, %v1408
        %v1410 = vrot.slane %v328, %v1409
        %v1411 = vlaneseq
        %v1412 = vshrl.u32 %v1411, 7
        %v1413 = vsub.s32 2, %v1412
        %v1414 = vrot.slane %v328, %v1413
        %v1417 = vlaneseq
        %v1418 = vshrl.u32 %v1417, 7
        %v1419 = vsub.s32 0, %v1418
        %v1420 = vrot.slane %v1410, %v1419
        %v1421 = vlaneseq
        %v1422 = vshrl.u32 %v1421, 7
        %v1423 = vsub.s32 0, %v1422
        %v1424 = vrot.slane %v1414, %v1423
        %v1425 = vadd.f32 %v1374, %v1420
        %v1426 = vadd.f32 %v1375, %v1424
        %v1427 = vadd.f32 %v1376, %v1420
        %v1428 = vadd.f32 %v1377, %v1424
        %v1429 = vadd.f32 %v1378, %v1420
        %v1430 = vadd.f32 %v1379, %v1424
        %v1431 = vadd.f32 %v1380, %v1420
        %v1432 = vadd.f32 %v1381, %v1424
        %v1433 = vadd.f32 %v1382, %v1420
        %v1434 = vadd.f32 %v1383, %v1424
        %v1435 = vadd.f32 %v1384, %v1420
        %v1436 = vadd.f32 %v1385, %v1424
        %v1437 = vadd.f32 %v1386, %v1420
        %v1438 = vadd.f32 %v1387, %v1424
        %v1439 = vadd.f32 %v1388, %v1420
        %v1440 = vadd.f32 %v1389, %v1424
        %v1441 = vadd.f32 %v1390, %v1420
        %v1442 = vadd.f32 %v1391, %v1424
        %v1443 = vadd.f32 %v1392, %v1420
        %v1444 = vadd.f32 %v1393, %v1424
        %v1445 = vadd.f32 %v1394, %v1420
        %v1446 = vadd.f32 %v1395, %v1424
        %v1447 = vadd.f32 %v1396, %v1420
        %v1448 = vadd.f32 %v1397, %v1424
        %v1449 = vadd.f32 %v1398, %v1420
        %v1450 = vadd.f32 %v1399, %v1424
        %v1451 = vadd.f32 %v1400, %v1420
        %v1452 = vadd.f32 %v1401, %v1424
        %v1453 = vadd.f32 %v1402, %v1420
        %v1454 = vadd.f32 %v1403, %v1424
        %v1455 = vadd.f32 %v1404, %v1420
        %v1456 = vadd.f32 %v1405, %v1424
        %v1457 = vpack.c.bf16 %v1427, %v1425
        %v1458 = vpack.c.bf16 %v1428, %v1426
        %v1459 = vpack.c.bf16 %v1431, %v1429
        %v1460 = vpack.c.bf16 %v1432, %v1430
        %v1461 = vpack.c.bf16 %v1435, %v1433
        %v1462 = vpack.c.bf16 %v1436, %v1434
        %v1463 = vpack.c.bf16 %v1439, %v1437
        %v1464 = vpack.c.bf16 %v1440, %v1438
        %v1465 = vpack.c.bf16 %v1443, %v1441
        %v1466 = vpack.c.bf16 %v1444, %v1442
        %v1467 = vpack.c.bf16 %v1447, %v1445
        %v1468 = vpack.c.bf16 %v1448, %v1446
        %v1469 = vpack.c.bf16 %v1451, %v1449
        %v1470 = vpack.c.bf16 %v1452, %v1450
        %v1471 = vpack.c.bf16 %v1455, %v1453
        %v1472 = vpack.c.bf16 %v1456, %v1454
        %v1489 = vunpack.c.l.b16 %v1457
        %v1490 = vunpack.c.l.b16 %v1458
        %v1491 = vunpack.c.h.b16 %v1457
        %v1492 = vunpack.c.h.b16 %v1458
        %v1493 = vunpack.c.l.b16 %v1459
        %v1494 = vunpack.c.l.b16 %v1460
        %v1495 = vunpack.c.h.b16 %v1459
        %v1496 = vunpack.c.h.b16 %v1460
        %v1497 = vunpack.c.l.b16 %v1461
        %v1498 = vunpack.c.l.b16 %v1462
        %v1499 = vunpack.c.h.b16 %v1461
        %v1500 = vunpack.c.h.b16 %v1462
        %v1501 = vunpack.c.l.b16 %v1463
        %v1502 = vunpack.c.l.b16 %v1464
        %v1503 = vunpack.c.h.b16 %v1463
        %v1504 = vunpack.c.h.b16 %v1464
        %v1505 = vunpack.c.l.b16 %v1465
        %v1506 = vunpack.c.l.b16 %v1466
        %v1507 = vunpack.c.h.b16 %v1465
        %v1508 = vunpack.c.h.b16 %v1466
        %v1509 = vunpack.c.l.b16 %v1467
        %v1510 = vunpack.c.l.b16 %v1468
        %v1511 = vunpack.c.h.b16 %v1467
        %v1512 = vunpack.c.h.b16 %v1468
        %v1513 = vunpack.c.l.b16 %v1469
        %v1514 = vunpack.c.l.b16 %v1470
        %v1515 = vunpack.c.h.b16 %v1469
        %v1516 = vunpack.c.h.b16 %v1470
        %v1517 = vunpack.c.l.b16 %v1471
        %v1518 = vunpack.c.l.b16 %v1472
        %v1519 = vunpack.c.h.b16 %v1471
        %v1520 = vunpack.c.h.b16 %v1472
        %v1521 = vpack.c.b16 %v1490, %v1489
        %v1522 = vpack.c.b16 %v1492, %v1491
        %v1523 = vpack.c.b16 %v1494, %v1493
        %v1524 = vpack.c.b16 %v1496, %v1495
        %v1525 = vpack.c.b16 %v1498, %v1497
        %v1526 = vpack.c.b16 %v1500, %v1499
        %v1527 = vpack.c.b16 %v1502, %v1501
        %v1528 = vpack.c.b16 %v1504, %v1503
        %v1529 = vpack.c.b16 %v1506, %v1505
        %v1530 = vpack.c.b16 %v1508, %v1507
        %v1531 = vpack.c.b16 %v1510, %v1509
        %v1532 = vpack.c.b16 %v1512, %v1511
        %v1533 = vpack.c.b16 %v1514, %v1513
        %v1534 = vpack.c.b16 %v1516, %v1515
        %v1535 = vpack.c.b16 %v1518, %v1517
        %v1536 = vpack.c.b16 %v1520, %v1519
        %s1553 = smul.u32 0, 2
        %s1554 = smul.addr %s1553, 4
        %s1555 = scalar_lea.vmem %s299, %s1554 [#allocation5]
        %1556 = vst [vmem:[%s1555] sm:$0xff] %v1521
        %1557 = vst [vmem:[%s1555 + $0x8] sm:$0xff] %v1522
        %1558 = vst [vmem:[%s1555 + $0x10] sm:$0xff] %v1523
        %1559 = vst [vmem:[%s1555 + $0x18] sm:$0xff] %v1524
        %1560 = vst [vmem:[%s1555 + $0x20] sm:$0xff] %v1525
        %1561 = vst [vmem:[%s1555 + $0x28] sm:$0xff] %v1526
        %1562 = vst [vmem:[%s1555 + $0x30] sm:$0xff] %v1527
        %1563 = vst [vmem:[%s1555 + $0x38] sm:$0xff] %v1528
        %1564 = vst [vmem:[%s1555 + $0x40] sm:$0xff] %v1529
        %1565 = vst [vmem:[%s1555 + $0x48] sm:$0xff] %v1530
        %1566 = vst [vmem:[%s1555 + $0x50] sm:$0xff] %v1531
        %1567 = vst [vmem:[%s1555 + $0x58] sm:$0xff] %v1532
        %1568 = vst [vmem:[%s1555 + $0x60] sm:$0xff] %v1533
        %1569 = vst [vmem:[%s1555 + $0x68] sm:$0xff] %v1534
        %1570 = vst [vmem:[%s1555 + $0x70] sm:$0xff] %v1535
        %1571 = vst [vmem:[%s1555 + $0x78] sm:$0xff] %v1536
        %s1572 = sand.u32 %s182, 1
        %s1573 = scalar_lea.sflag [#allocation4], %s1572
        %s1574 = sand.u32 %s182, 1
        %s1575 = smul.addr %s1574, 128
        %s1576 = scalar_lea.vmem [#allocation5], %s1575
        // Predicated region
        $region53: #{projection_head.1} parent=47 // pred_check
          %p1577 = pneg %p192
        $region54: #{projection_head.1} parent=47 // pred_check_branch
          %1579 = sbr.rel (%p1577) target = $region56
        $region55: #{projection_head.1} parent=47 // pred_region
          %s1580 = smul.u32 16, %s22
          %s1581 = ssub.s32 25, %s1580
          %p1582 = scmp.lt.s32.totalorder %s1581, 16
          %s1583 = scalar_select %p1582, %s1581, 16
          %s1584 = smul.u32 64, %s1583
          %s1585 = smul.u32 %s1584, 2
          %s1587 = ssub.s32 2048, %s1585
          %1588 = vsyncadd %s1573, %s1587
          %p1589 = scmp.ne.s32.totalorder 0, %s1585
          %s1590 = smul.addr %s1580, 2
          %s1591 = smul.addr %s1590, 64
          %s1592 = scalar_lea.hbm %s7, %s1591
          %s1593 = smul.u32 8, %s1583
          %s1594 = sshll.u32 %s1576, 4
          %s1595 = int_to_ptr.vmem [resolvable:$true] %s1594
          %s1596 = sshll.u32 %s1593, 4
          %1600 = dma.vmem_to_hbm [thread:$0]  (%p1589), %s1595, %s1596, %s1592, %s1573, 128, 128, 8
        $region56: #{projection_head.1} parent=47 // pred_fallthru
          _
      $region48: #{projection_head.1} parent=5 // pred_fallthru
        _
      %p1601 = scmp.le.s32.totalorder 2, %s17
      // Predicated region
      $region57: #{projection_head.1} parent=5 // pred_check
        %p1602 = pneg %p1601
      $region58: #{projection_head.1} parent=5 // pred_check_branch
        %1604 = sbr.rel (%p1602) target = $region60
      $region59: #{projection_head.1} parent=5 // pred_region
        %s1605 = ssub.s32 %s17, 2
        // Predicated region
        $region61: #{projection_head.1} parent=59 // pred_check
          %p1606 = pneg %p198
        $region62: #{projection_head.1} parent=59 // pred_check_branch
          %1608 = sbr.rel (%p1606) target = $region64
        $region63: #{projection_head.1} parent=59 // pred_region
          %s1609 = sand.u32 %s183, 1
          %s1610 = scalar_lea.sflag [#allocation4], %s1609
          %s1611 = sand.u32 %s183, 1
          %s1612 = smul.addr %s1611, 128
          %s1613 = scalar_lea.vmem [#allocation5], %s1612
          %1614 = dma.done %s1610, 2048
        $region64: #{projection_head.1} parent=59 // pred_fallthru
          _
      $region60: #{projection_head.1} parent=5 // pred_fallthru
        _
    $region6: #{projection_head.1} parent=1 // loop_footer
      %s21 = sadd.s32 1, %s17
    $region7: #{projection_head.1} parent=1 // loop_footer_branch
      %16 = sbr.rel target = $region3
    $region8: #{projection_head.1} parent=1 // loop_exit
      _
    %1615 = vsyncpa [#allocation3], 1
    %s1616 = scalar_lea.sflag [#allocation3], 1
    %1617 = vsyncpa %s1616, 1
    %1618 = vsyncpa [#allocation4], 1
    %s1619 = scalar_lea.sflag [#allocation4], 1
    %1620 = vsyncpa %s1619, 1

</llo_original>
